<compile_context>
chip_gen: v5e
topology: v5e:2x2
jax: 0.10.0
libtpu: 0.0.40
codegen_flags: <defaults>
</compile_context>

<pallas_src>
import functools

import jax
import jax.numpy as jnp
from jax.experimental import pallas as pl
from jax.experimental.pallas import tpu as pltpu


def _silu(v):
    return v * jax.nn.sigmoid(v)


def micro_residual_kernel(x_ref, a_ref, pw_ref, se1_ref, o_ref,
                          *, NB, H, W, C, dil, Cr):
    """NB images per grid step; activations lane-dense as (NB, H, W*C).

    a_ref rows: [0:9]  depthwise taps (tiled over W, BN1 scale folded)
                [9]    BN1 bias (tiled)
                [10]   BN2 bias (tiled)
                [11:11+Cr] SE second-layer weight (tiled over W)
    pw_ref : block-diagonal pointwise weight, bf16, BN2 scale folded, (W*C, W*C)
    se1_ref: SE first-layer weight tiled over W with 1/(H*W) pooling folded, (W*C, Cr)
    """
    WC = W * C
    M = NB * H

    xin = x_ref[...]                                      # (NB, H, WC) bf16
    x = xin.reshape(M, WC).astype(jnp.float32)            # depthwise/residual in f32

    # ---- halo masks, hoisted: computed once, reused by all 8 shifted taps ----
    row = jax.lax.broadcasted_iota(jnp.int32, (M, WC), 0)
    col = jax.lax.broadcasted_iota(jnp.int32, (M, WC), 1)
    h_loc = row % H                                       # row index within an image
    row_ok_pos = h_loc < (H - dil)                        # tap reads row h + dil
    row_ok_neg = h_loc >= dil                             # tap reads row h - dil
    col_ok_pos = col < (W - dil) * C                      # tap reads col w + dil
    col_ok_neg = col >= dil * C                           # tap reads col w - dil

    # ---- row-shifted variants (2 XLU rolls, row mask applied once each) ----
    x_rows = []
    for ki in range(3):
        di = (ki - 1) * dil                               # source row offset
        if di == 0:
            x_rows.append(x)
        else:
            xr = pltpu.roll(x, (-di) % M, axis=0)         # xr[i] = x[i + di] (wrapped)
            x_rows.append(jnp.where(row_ok_pos if di > 0 else row_ok_neg, xr, 0.0))

    # ---- depthwise 3x3 dilated conv: 9 taps (XLU rolls * tiled weights) ----
    acc = jnp.zeros((M, WC), jnp.float32)
    for ki in range(3):
        xr = x_rows[ki]
        for kj in range(3):
            dj = (kj - 1) * dil                           # source col (W) offset
            if dj == 0:
                xc = xr
            else:
                xc = pltpu.roll(xr, (-dj * C) % WC, axis=1)
                xc = jnp.where(col_ok_pos if dj > 0 else col_ok_neg, xc, 0.0)
            acc = acc + xc * a_ref[3 * ki + kj]

    # ---- BN1 (scale folded into taps) + SiLU ----
    y = _silu(acc + a_ref[9])

    # ---- pointwise 1x1 conv: one lane-dense bf16 MXU matmul over NB*H rows ----
    z = jnp.dot(y.astype(jnp.bfloat16), pw_ref[...],
                preferred_element_type=jnp.float32)       # (M, WC) f32
    z = z + a_ref[10]                                     # BN2 bias; Dropout2d(0) = identity

    # ---- Squeeze-Excite, batched over the NB images of this block ----
    z3 = z.reshape(NB, H, WC)
    pooled = jnp.sum(z3, axis=1)                          # (NB, WC); 1/(H*W) folded into se1
    h = _silu(jnp.dot(pooled, se1_ref[...],
                      preferred_element_type=jnp.float32))              # (NB, Cr)
    gate = jax.nn.sigmoid(
        jnp.dot(h, a_ref[11:11 + Cr, :],
                preferred_element_type=jnp.float32))      # (NB, WC), already W-tiled

    # ---- residual add (f32) + SiLU ----
    x3 = x.reshape(NB, H, WC)
    o_ref[...] = _silu(x3 + z3 * gate[:, None, :]).astype(o_ref.dtype)


def pack_params(params, H, W):
    """Fold BN scales into the conv weights and re-layout everything lane-dense."""
    dw = params["dw_w"]                                   # (3, 3, C)
    C = dw.shape[-1]
    Cr = params["se_w1"].shape[1]
    WC = W * C
    s1 = params["s1"].reshape(-1)
    b1 = params["b1"].reshape(-1)
    s2 = params["s2"].reshape(-1)
    b2 = params["b2"].reshape(-1)

    taps = (dw * s1[None, None, :]).reshape(9, C)         # BN1 scale folded
    a_rows = [jnp.tile(taps, (1, W)),                     # (9, WC)
              jnp.tile(b1, W)[None, :],                   # (1, WC)  BN1 bias
              jnp.tile(b2, W)[None, :],                   # (1, WC)  BN2 bias
              jnp.tile(params["se_w2"], (1, W))]          # (Cr, WC) SE layer 2
    n_rows = 9 + 2 + Cr
    pad = (-n_rows) % 8
    if pad:
        a_rows.append(jnp.zeros((pad, WC), jnp.float32))
    A = jnp.concatenate(a_rows, axis=0).astype(jnp.float32)

    pw_f = params["pw_w"] * s2[None, :]                   # BN2 scale into columns
    pw_big = jnp.kron(jnp.eye(W, dtype=jnp.float32), pw_f).astype(jnp.bfloat16)  # (WC, WC)

    se1 = (jnp.tile(params["se_w1"], (W, 1)) / float(H * W)).astype(jnp.float32)  # (WC, Cr)
    return {"A": A, "pw_big": pw_big, "se1": se1, "Cr": Cr}


def _choose_nb(N, H, target_rows=512, max_nb=32):
    """Images per grid step: make the matmul M-dim large (>=256 rows ideally)
    while keeping >= 2 grid steps (v7x has 2 TCs) and staying comfortably under
    the default scoped-VMEM limit (16 MiB on v5e)."""
    nb = max(1, min(max_nb, target_rows // max(H, 1)))
    if N >= 2:
        nb = min(nb, N // 2)                              # leave >=2 steps for megacore
    nb = max(1, min(nb, N))
    while N % nb:                                         # must divide the batch
        nb -= 1
    return nb


def micro_residual_forward(x_nchw, packed, dil=1, nb=None):
    N, C, H, W = x_nchw.shape
    WC = W * C
    Cr = packed["Cr"]
    A, pw_big, se1 = packed["A"], packed["pw_big"], packed["se1"]
    AR = A.shape[0]

    if nb is None:
        nb = _choose_nb(N, H)
    assert N % nb == 0
    steps = N // nb

    # NCHW -> NHWC -> lane-dense (N, H, W*C); bf16 at the kernel boundary halves
    # activation HBM traffic (in-kernel depthwise/residual math stays f32).
    x2d = jnp.transpose(x_nchw, (0, 2, 3, 1)).reshape(N, H, WC).astype(jnp.bfloat16)

    kernel = functools.partial(micro_residual_kernel,
                               NB=nb, H=H, W=W, C=C, dil=dil, Cr=Cr)

    grid_spec = pltpu.PrefetchScalarGridSpec(
        num_scalar_prefetch=0,
        grid=(steps,),
        in_specs=[
            pl.BlockSpec((nb, H, WC), lambda n: (n, 0, 0)),   # activations (lane dense, bf16)
            pl.BlockSpec((AR, WC), lambda n: (0, 0)),         # packed small params
            pl.BlockSpec((WC, WC), lambda n: (0, 0)),         # block-diag pointwise (bf16)
            pl.BlockSpec((WC, Cr), lambda n: (0, 0)),         # SE layer-1 (pool folded)
        ],
        out_specs=pl.BlockSpec((nb, H, WC), lambda n: (n, 0, 0)),
    )

    cost = pl.CostEstimate(
        flops=int(2 * N * H * WC * WC + 18 * N * H * WC + 4 * N * WC * Cr),
        transcendentals=int(3 * N * H * WC),
        bytes_accessed=int(2 * N * H * WC * 2 + WC * WC * 2 + A.size * 4 + se1.size * 4),
    )

    out2d = pl.pallas_call(
        kernel,
        out_shape=jax.ShapeDtypeStruct((N, H, WC), jnp.bfloat16),
        grid_spec=grid_spec,
        compiler_params=pltpu.CompilerParams(
            dimension_semantics=("parallel",)),
        cost_estimate=cost,
    )(x2d, A, pw_big, se1)

    return jnp.transpose(out2d.reshape(N, H, W, C), (0, 3, 1, 2)).astype(x_nchw.dtype)


def init_params(key, ch, r=4):
    k1, k2, k3, k4 = jax.random.split(key, 4)
    eps = 1e-3
    # Conv weights (deterministic random); BN: PyTorch-default eval-mode stats.
    dw_w = jax.random.normal(k1, (3, 3, ch), jnp.float32) * 0.1   # depthwise (kh,kw,C)
    pw_w = jax.random.normal(k2, (ch, ch), jnp.float32) * 0.1     # (Cin, Cout), bias=False
    se_w1 = jax.random.normal(k3, (ch, ch // r), jnp.float32) * 0.1
    se_w2 = jax.random.normal(k4, (ch // r, ch), jnp.float32) * 0.1
    gamma = jnp.ones((ch,), jnp.float32)
    beta = jnp.zeros((ch,), jnp.float32)
    mean = jnp.zeros((ch,), jnp.float32)
    var = jnp.ones((ch,), jnp.float32)
    s1 = (gamma / jnp.sqrt(var + eps)).reshape(1, ch)
    b1 = (beta - mean * s1[0]).reshape(1, ch)
    s2 = (gamma / jnp.sqrt(var + eps)).reshape(1, ch)
    b2 = (beta - mean * s2[0]).reshape(1, ch)
    return {"dw_w": dw_w, "pw_w": pw_w, "se_w1": se_w1, "se_w2": se_w2,
            "s1": s1, "b1": b1, "s2": s2, "b2": b2}


def ref_forward_nchw(x_nchw, params, dil=1):
    """Pure-JAX reference mirroring the PyTorch module (eval mode, f32)."""
    C = x_nchw.shape[1]
    dw_ker = params["dw_w"].transpose(2, 0, 1)[:, None, :, :]  # (C,1,3,3) OIHW
    y = jax.lax.conv_general_dilated(
        x_nchw, dw_ker, window_strides=(1, 1),
        padding=[(dil, dil), (dil, dil)], rhs_dilation=(dil, dil),
        feature_group_count=C, dimension_numbers=("NCHW", "OIHW", "NCHW"))
    s1 = params["s1"][0]; b1 = params["b1"][0]
    y = y * s1[None, :, None, None] + b1[None, :, None, None]
    y = _silu(y)
    y = jnp.einsum("nchw,cd->ndhw", y, params["pw_w"])
    s2 = params["s2"][0]; b2 = params["b2"][0]
    y = y * s2[None, :, None, None] + b2[None, :, None, None]
    pooled = y.mean(axis=(2, 3))                          # (N, C)
    h = _silu(pooled @ params["se_w1"])
    a = jax.nn.sigmoid(h @ params["se_w2"])
    y = y * a[:, :, None, None]
    out = x_nchw + y
    return _silu(out)


if __name__ == "__main__":
    N, C, H, W = 8, 16, 16, 16
    dil = 1
    key = jax.random.PRNGKey(0)
    kx, kp = jax.random.split(key)
    x_nchw = jax.random.normal(kx, (N, C, H, W), jnp.float32)
    params = init_params(kp, C)
    packed = pack_params(params, H, W)

    out = micro_residual_forward(x_nchw, packed, dil=dil)
    out = jax.block_until_ready(out)

    # The kernel consumes/produces bf16 activations and runs the pointwise 1x1
    # with bf16 MXU operands (f32 accumulation). Compare against the f32
    # reference evaluated on the same bf16-rounded input, with bf16-sized
    # tolerances for the remaining in-kernel bf16 matmul/store error.
    x_q = x_nchw.astype(jnp.bfloat16).astype(jnp.float32)
    ref = ref_forward_nchw(x_q, params, dil=dil)
    err = float(jnp.max(jnp.abs(out - ref)))
    assert jnp.allclose(out, ref, atol=1e-2, rtol=1e-2), err
    print("KERNEL_OK")
</pallas_src>

<mosaic_0001>
module attributes {stable_mosaic.version = 11 : i64} {
  func.func @micro_residual_kernel(%arg0: i32, %arg1: memref<4x16x256xbf16, #tpu.memory_space<vmem>>, %arg2: memref<16x256xf32, #tpu.memory_space<vmem>>, %arg3: memref<256x256xbf16, #tpu.memory_space<vmem>>, %arg4: memref<256x4xf32, #tpu.memory_space<vmem>>, %arg5: memref<4x16x256xbf16, #tpu.memory_space<vmem>>) attributes {dimension_semantics = [#tpu.dimension_semantics<parallel>], iteration_bounds = array<i64: 2>, scalar_prefetch = 0 : i64, scratch_operands = 0 : i64, tpu.core_type = #tpu.core_type<tc>, window_params = [{transform_indices = @transform_0, window_bounds = array<i64: 4, 16, 256>}, {pipeline_mode = #tpu.pipeline_mode<synchronous>, transform_indices = @transform_1, window_bounds = array<i64: 16, 256>}, {pipeline_mode = #tpu.pipeline_mode<synchronous>, transform_indices = @transform_2, window_bounds = array<i64: 256, 256>}, {pipeline_mode = #tpu.pipeline_mode<synchronous>, transform_indices = @transform_3, window_bounds = array<i64: 256, 4>}, {transform_indices = @transform_4, window_bounds = array<i64: 4, 16, 256>}]} {
    %c0 = arith.constant 0 : index
    %c0_0 = arith.constant 0 : index
    %c0_1 = arith.constant 0 : index
    %0 = vector.load %arg1[%c0, %c0_0, %c0_1] : memref<4x16x256xbf16, #tpu.memory_space<vmem>>, vector<4x16x256xbf16>
    %1 = vector.shape_cast %0 : vector<4x16x256xbf16> to vector<64x256xbf16>
    %2 = arith.extf %1 : vector<64x256xbf16> to vector<64x256xf32>
    %3 = tpu.iota {dimensions = array<i32: 0>} : vector<64x256xi32>
    %4 = tpu.iota {dimensions = array<i32: 1>} : vector<64x256xi32>
    %c16_i32 = arith.constant 16 : i32
    %c0_i32 = arith.constant 0 : i32
    %5 = arith.cmpi eq, %c16_i32, %c0_i32 : i32
    %c1_i32 = arith.constant 1 : i32
    %6 = arith.select %5, %c1_i32, %c16_i32 : i32
    %7 = vector.broadcast %6 : i32 to vector<64x256xi32>
    %8 = arith.remsi %3, %7 : vector<64x256xi32>
    %c0_i32_2 = arith.constant 0 : i32
    %9 = vector.broadcast %c0_i32_2 : i32 to vector<64x256xi32>
    %10 = arith.cmpi ne, %8, %9 : vector<64x256xi32>
    %c0_i32_3 = arith.constant 0 : i32
    %11 = vector.broadcast %c0_i32_3 : i32 to vector<64x256xi32>
    %12 = arith.cmpi slt, %8, %11 : vector<64x256xi32>
    %c0_i32_4 = arith.constant 0 : i32
    %13 = arith.cmpi slt, %6, %c0_i32_4 : i32
    %14 = vector.broadcast %13 : i1 to vector<64x256xi1>
    %15 = vector.broadcast %14 : vector<64x256xi1> to vector<64x256xi1>
    %16 = arith.xori %12, %15 : vector<64x256xi1>
    %17 = arith.andi %16, %10 : vector<64x256xi1>
    %18 = vector.broadcast %6 : i32 to vector<64x256xi32>
    %19 = arith.addi %8, %18 : vector<64x256xi32>
    %20 = arith.select %17, %19, %8 : vector<64x256xi1>, vector<64x256xi32>
    %c15_i32 = arith.constant 15 : i32
    %21 = vector.broadcast %c15_i32 : i32 to vector<64x256xi32>
    %22 = arith.cmpi slt, %20, %21 : vector<64x256xi32>
    %c1_i32_5 = arith.constant 1 : i32
    %23 = vector.broadcast %c1_i32_5 : i32 to vector<64x256xi32>
    %24 = arith.cmpi sge, %20, %23 : vector<64x256xi32>
    %c240_i32 = arith.constant 240 : i32
    %25 = vector.broadcast %c240_i32 : i32 to vector<64x256xi32>
    %26 = arith.cmpi slt, %4, %25 : vector<64x256xi32>
    %c16_i32_6 = arith.constant 16 : i32
    %27 = vector.broadcast %c16_i32_6 : i32 to vector<64x256xi32>
    %28 = arith.cmpi sge, %4, %27 : vector<64x256xi32>
    %c1_i32_7 = arith.constant 1 : i32
    %29 = tpu.dynamic_rotate %2 by %c1_i32_7 dim 0 : vector<64x256xf32>, i32 -> vector<64x256xf32>
    %cst = arith.constant 0.000000e+00 : f32
    %30 = vector.broadcast %cst : f32 to vector<64x256xf32>
    %31 = arith.select %24, %29, %30 : vector<64x256xi1>, vector<64x256xf32>
    %c63_i32 = arith.constant 63 : i32
    %32 = tpu.dynamic_rotate %2 by %c63_i32 dim 0 : vector<64x256xf32>, i32 -> vector<64x256xf32>
    %cst_8 = arith.constant 0.000000e+00 : f32
    %33 = vector.broadcast %cst_8 : f32 to vector<64x256xf32>
    %34 = arith.select %22, %32, %33 : vector<64x256xi1>, vector<64x256xf32>
    %cst_9 = arith.constant 0.000000e+00 : f32
    %35 = vector.broadcast %cst_9 : f32 to vector<64x256xf32>
    %c16_i32_10 = arith.constant 16 : i32
    %36 = tpu.dynamic_rotate %31 by %c16_i32_10 dim 1 : vector<64x256xf32>, i32 -> vector<64x256xf32>
    %cst_11 = arith.constant 0.000000e+00 : f32
    %37 = vector.broadcast %cst_11 : f32 to vector<64x256xf32>
    %38 = arith.select %28, %36, %37 : vector<64x256xi1>, vector<64x256xf32>
    %c0_12 = arith.constant 0 : index
    %c0_13 = arith.constant 0 : index
    %39 = vector.load %arg2[%c0_12, %c0_13] : memref<16x256xf32, #tpu.memory_space<vmem>>, vector<1x256xf32>
    %40 = vector.shape_cast %39 : vector<1x256xf32> to vector<256xf32>
    %41 = vector.shape_cast %40 : vector<256xf32> to vector<1x256xf32>
    %42 = vector.broadcast %41 : vector<1x256xf32> to vector<64x256xf32>
    %43 = arith.mulf %38, %42 : vector<64x256xf32>
    %44 = arith.addf %35, %43 : vector<64x256xf32>
    %c1 = arith.constant 1 : index
    %c0_14 = arith.constant 0 : index
    %45 = vector.load %arg2[%c1, %c0_14] : memref<16x256xf32, #tpu.memory_space<vmem>>, vector<1x256xf32>
    %46 = vector.shape_cast %45 : vector<1x256xf32> to vector<256xf32>
    %47 = vector.shape_cast %46 : vector<256xf32> to vector<1x256xf32>
    %48 = vector.broadcast %47 : vector<1x256xf32> to vector<64x256xf32>
    %49 = arith.mulf %31, %48 : vector<64x256xf32>
    %50 = arith.addf %44, %49 : vector<64x256xf32>
    %c240_i32_15 = arith.constant 240 : i32
    %51 = tpu.dynamic_rotate %31 by %c240_i32_15 dim 1 : vector<64x256xf32>, i32 -> vector<64x256xf32>
    %cst_16 = arith.constant 0.000000e+00 : f32
    %52 = vector.broadcast %cst_16 : f32 to vector<64x256xf32>
    %53 = arith.select %26, %51, %52 : vector<64x256xi1>, vector<64x256xf32>
    %c2 = arith.constant 2 : index
    %c0_17 = arith.constant 0 : index
    %54 = vector.load %arg2[%c2, %c0_17] : memref<16x256xf32, #tpu.memory_space<vmem>>, vector<1x256xf32>
    %55 = vector.shape_cast %54 : vector<1x256xf32> to vector<256xf32>
    %56 = vector.shape_cast %55 : vector<256xf32> to vector<1x256xf32>
    %57 = vector.broadcast %56 : vector<1x256xf32> to vector<64x256xf32>
    %58 = arith.mulf %53, %57 : vector<64x256xf32>
    %59 = arith.addf %50, %58 : vector<64x256xf32>
    %c16_i32_18 = arith.constant 16 : i32
    %60 = tpu.dynamic_rotate %2 by %c16_i32_18 dim 1 : vector<64x256xf32>, i32 -> vector<64x256xf32>
    %cst_19 = arith.constant 0.000000e+00 : f32
    %61 = vector.broadcast %cst_19 : f32 to vector<64x256xf32>
    %62 = arith.select %28, %60, %61 : vector<64x256xi1>, vector<64x256xf32>
    %c3 = arith.constant 3 : index
    %c0_20 = arith.constant 0 : index
    %63 = vector.load %arg2[%c3, %c0_20] : memref<16x256xf32, #tpu.memory_space<vmem>>, vector<1x256xf32>
    %64 = vector.shape_cast %63 : vector<1x256xf32> to vector<256xf32>
    %65 = vector.shape_cast %64 : vector<256xf32> to vector<1x256xf32>
    %66 = vector.broadcast %65 : vector<1x256xf32> to vector<64x256xf32>
    %67 = arith.mulf %62, %66 : vector<64x256xf32>
    %68 = arith.addf %59, %67 : vector<64x256xf32>
    %c4 = arith.constant 4 : index
    %c0_21 = arith.constant 0 : index
    %69 = vector.load %arg2[%c4, %c0_21] : memref<16x256xf32, #tpu.memory_space<vmem>>, vector<1x256xf32>
    %70 = vector.shape_cast %69 : vector<1x256xf32> to vector<256xf32>
    %71 = vector.shape_cast %70 : vector<256xf32> to vector<1x256xf32>
    %72 = vector.broadcast %71 : vector<1x256xf32> to vector<64x256xf32>
    %73 = arith.mulf %2, %72 : vector<64x256xf32>
    %74 = arith.addf %68, %73 : vector<64x256xf32>
    %c240_i32_22 = arith.constant 240 : i32
    %75 = tpu.dynamic_rotate %2 by %c240_i32_22 dim 1 : vector<64x256xf32>, i32 -> vector<64x256xf32>
    %cst_23 = arith.constant 0.000000e+00 : f32
    %76 = vector.broadcast %cst_23 : f32 to vector<64x256xf32>
    %77 = arith.select %26, %75, %76 : vector<64x256xi1>, vector<64x256xf32>
    %c5 = arith.constant 5 : index
    %c0_24 = arith.constant 0 : index
    %78 = vector.load %arg2[%c5, %c0_24] : memref<16x256xf32, #tpu.memory_space<vmem>>, vector<1x256xf32>
    %79 = vector.shape_cast %78 : vector<1x256xf32> to vector<256xf32>
    %80 = vector.shape_cast %79 : vector<256xf32> to vector<1x256xf32>
    %81 = vector.broadcast %80 : vector<1x256xf32> to vector<64x256xf32>
    %82 = arith.mulf %77, %81 : vector<64x256xf32>
    %83 = arith.addf %74, %82 : vector<64x256xf32>
    %c16_i32_25 = arith.constant 16 : i32
    %84 = tpu.dynamic_rotate %34 by %c16_i32_25 dim 1 : vector<64x256xf32>, i32 -> vector<64x256xf32>
    %cst_26 = arith.constant 0.000000e+00 : f32
    %85 = vector.broadcast %cst_26 : f32 to vector<64x256xf32>
    %86 = arith.select %28, %84, %85 : vector<64x256xi1>, vector<64x256xf32>
    %c6 = arith.constant 6 : index
    %c0_27 = arith.constant 0 : index
    %87 = vector.load %arg2[%c6, %c0_27] : memref<16x256xf32, #tpu.memory_space<vmem>>, vector<1x256xf32>
    %88 = vector.shape_cast %87 : vector<1x256xf32> to vector<256xf32>
    %89 = vector.shape_cast %88 : vector<256xf32> to vector<1x256xf32>
    %90 = vector.broadcast %89 : vector<1x256xf32> to vector<64x256xf32>
    %91 = arith.mulf %86, %90 : vector<64x256xf32>
    %92 = arith.addf %83, %91 : vector<64x256xf32>
    %c7 = arith.constant 7 : index
    %c0_28 = arith.constant 0 : index
    %93 = vector.load %arg2[%c7, %c0_28] : memref<16x256xf32, #tpu.memory_space<vmem>>, vector<1x256xf32>
    %94 = vector.shape_cast %93 : vector<1x256xf32> to vector<256xf32>
    %95 = vector.shape_cast %94 : vector<256xf32> to vector<1x256xf32>
    %96 = vector.broadcast %95 : vector<1x256xf32> to vector<64x256xf32>
    %97 = arith.mulf %34, %96 : vector<64x256xf32>
    %98 = arith.addf %92, %97 : vector<64x256xf32>
    %c240_i32_29 = arith.constant 240 : i32
    %99 = tpu.dynamic_rotate %34 by %c240_i32_29 dim 1 : vector<64x256xf32>, i32 -> vector<64x256xf32>
    %cst_30 = arith.constant 0.000000e+00 : f32
    %100 = vector.broadcast %cst_30 : f32 to vector<64x256xf32>
    %101 = arith.select %26, %99, %100 : vector<64x256xi1>, vector<64x256xf32>
    %c8 = arith.constant 8 : index
    %c0_31 = arith.constant 0 : index
    %102 = vector.load %arg2[%c8, %c0_31] : memref<16x256xf32, #tpu.memory_space<vmem>>, vector<1x256xf32>
    %103 = vector.shape_cast %102 : vector<1x256xf32> to vector<256xf32>
    %104 = vector.shape_cast %103 : vector<256xf32> to vector<1x256xf32>
    %105 = vector.broadcast %104 : vector<1x256xf32> to vector<64x256xf32>
    %106 = arith.mulf %101, %105 : vector<64x256xf32>
    %107 = arith.addf %98, %106 : vector<64x256xf32>
    %c9 = arith.constant 9 : index
    %c0_32 = arith.constant 0 : index
    %108 = vector.load %arg2[%c9, %c0_32] : memref<16x256xf32, #tpu.memory_space<vmem>>, vector<1x256xf32>
    %109 = vector.shape_cast %108 : vector<1x256xf32> to vector<256xf32>
    %110 = vector.shape_cast %109 : vector<256xf32> to vector<1x256xf32>
    %111 = vector.broadcast %110 : vector<1x256xf32> to vector<64x256xf32>
    %112 = arith.addf %107, %111 : vector<64x256xf32>
    %113 = arith.negf %112 : vector<64x256xf32>
    %114 = math.exp %113 : vector<64x256xf32>
    %cst_33 = arith.constant 1.000000e+00 : f32
    %115 = vector.broadcast %cst_33 : f32 to vector<64x256xf32>
    %116 = arith.addf %115, %114 : vector<64x256xf32>
    %117 = arith.divf %115, %116 : vector<64x256xf32>
    %118 = arith.mulf %112, %117 : vector<64x256xf32>
    %119 = arith.truncf %118 : vector<64x256xf32> to vector<64x256xbf16>
    %c0_34 = arith.constant 0 : index
    %c0_35 = arith.constant 0 : index
    %120 = vector.load %arg3[%c0_34, %c0_35] : memref<256x256xbf16, #tpu.memory_space<vmem>>, vector<256x256xbf16>
    %cst_36 = arith.constant dense<0.000000e+00> : vector<64x256xf32>
    %121 = tpu.matmul %119, %120, %cst_36 {dimension_numbers = #tpu.dot_dimension_numbers<[1], [0], [0], [1], [0, 0, 1, 1], [], []>} : vector<64x256xbf16>, vector<256x256xbf16>, vector<64x256xf32> -> vector<64x256xf32>
    %c10 = arith.constant 10 : index
    %c0_37 = arith.constant 0 : index
    %122 = vector.load %arg2[%c10, %c0_37] : memref<16x256xf32, #tpu.memory_space<vmem>>, vector<1x256xf32>
    %123 = vector.shape_cast %122 : vector<1x256xf32> to vector<256xf32>
    %124 = vector.shape_cast %123 : vector<256xf32> to vector<1x256xf32>
    %125 = vector.broadcast %124 : vector<1x256xf32> to vector<64x256xf32>
    %126 = arith.addf %121, %125 : vector<64x256xf32>
    %127 = vector.shape_cast %126 : vector<64x256xf32> to vector<4x16x256xf32>
    %cst_38 = arith.constant dense<0.000000e+00> : vector<4x256xf32>
    %128 = vector.multi_reduction <add>, %127, %cst_38 [1] : vector<4x16x256xf32> to vector<4x256xf32>
    %c0_39 = arith.constant 0 : index
    %c0_40 = arith.constant 0 : index
    %129 = vector.load %arg4[%c0_39, %c0_40] : memref<256x4xf32, #tpu.memory_space<vmem>>, vector<256x4xf32>
    %cst_41 = arith.constant dense<0.000000e+00> : vector<4x4xf32>
    %130 = tpu.matmul %128, %129, %cst_41 {dimension_numbers = #tpu.dot_dimension_numbers<[1], [0], [0], [1], [0, 0, 1, 1], [], []>} : vector<4x256xf32>, vector<256x4xf32>, vector<4x4xf32> -> vector<4x4xf32>
    %131 = arith.negf %130 : vector<4x4xf32>
    %132 = math.exp %131 : vector<4x4xf32>
    %cst_42 = arith.constant 1.000000e+00 : f32
    %133 = vector.broadcast %cst_42 : f32 to vector<4x4xf32>
    %134 = arith.addf %133, %132 : vector<4x4xf32>
    %135 = arith.divf %133, %134 : vector<4x4xf32>
    %136 = arith.mulf %130, %135 : vector<4x4xf32>
    %c11 = arith.constant 11 : index
    %c0_43 = arith.constant 0 : index
    %137 = vector.load %arg2[%c11, %c0_43] : memref<16x256xf32, #tpu.memory_space<vmem>>, vector<4x256xf32>
    %cst_44 = arith.constant dense<0.000000e+00> : vector<4x256xf32>
    %138 = tpu.matmul %136, %137, %cst_44 {dimension_numbers = #tpu.dot_dimension_numbers<[1], [0], [0], [1], [0, 0, 1, 1], [], []>} : vector<4x4xf32>, vector<4x256xf32>, vector<4x256xf32> -> vector<4x256xf32>
    %139 = arith.negf %138 : vector<4x256xf32>
    %140 = math.exp %139 : vector<4x256xf32>
    %cst_45 = arith.constant 1.000000e+00 : f32
    %141 = vector.broadcast %cst_45 : f32 to vector<4x256xf32>
    %142 = arith.addf %141, %140 : vector<4x256xf32>
    %143 = arith.divf %141, %142 : vector<4x256xf32>
    %144 = vector.shape_cast %2 : vector<64x256xf32> to vector<4x16x256xf32>
    %145 = vector.shape_cast %143 : vector<4x256xf32> to vector<4x1x256xf32>
    %146 = vector.broadcast %145 : vector<4x1x256xf32> to vector<4x16x256xf32>
    %147 = arith.mulf %127, %146 : vector<4x16x256xf32>
    %148 = arith.addf %144, %147 : vector<4x16x256xf32>
    %149 = arith.negf %148 : vector<4x16x256xf32>
    %150 = math.exp %149 : vector<4x16x256xf32>
    %cst_46 = arith.constant 1.000000e+00 : f32
    %151 = vector.broadcast %cst_46 : f32 to vector<4x16x256xf32>
    %152 = arith.addf %151, %150 : vector<4x16x256xf32>
    %153 = arith.divf %151, %152 : vector<4x16x256xf32>
    %154 = arith.mulf %148, %153 : vector<4x16x256xf32>
    %155 = arith.truncf %154 : vector<4x16x256xf32> to vector<4x16x256xbf16>
    %c0_47 = arith.constant 0 : index
    %c0_48 = arith.constant 0 : index
    %c0_49 = arith.constant 0 : index
    %156 = vector.load %arg5[%c0_47, %c0_48, %c0_49] : memref<4x16x256xbf16, #tpu.memory_space<vmem>>, vector<4x16x256xbf16>
    tpu.vector_store %arg5[%c0_47, %c0_48, %c0_49], %155 {strides = array<i32>} : memref<4x16x256xbf16, #tpu.memory_space<vmem>>, vector<4x16x256xbf16>,
    return
  }
  func.func @transform_0(%arg0: i32) -> (i32, i32, i32) {
    %c0_i32 = arith.constant 0 : i32
    %c0_i32_0 = arith.constant 0 : i32
    %c0_i32_1 = arith.constant 0 : i32
    return %arg0, %c0_i32, %c0_i32_0 : i32, i32, i32
  }
  func.func @transform_1(%arg0: i32) -> (i32, i32) {
    %c0_i32 = arith.constant 0 : i32
    %c0_i32_0 = arith.constant 0 : i32
    %c0_i32_1 = arith.constant 0 : i32
    return %c0_i32, %c0_i32_0 : i32, i32
  }
  func.func @transform_2(%arg0: i32) -> (i32, i32) {
    %c0_i32 = arith.constant 0 : i32
    %c0_i32_0 = arith.constant 0 : i32
    %c0_i32_1 = arith.constant 0 : i32
    return %c0_i32, %c0_i32_0 : i32, i32
  }
  func.func @transform_3(%arg0: i32) -> (i32, i32) {
    %c0_i32 = arith.constant 0 : i32
    %c0_i32_0 = arith.constant 0 : i32
    %c0_i32_1 = arith.constant 0 : i32
    return %c0_i32, %c0_i32_0 : i32, i32
  }
  func.func @transform_4(%arg0: i32) -> (i32, i32, i32) {
    %c0_i32 = arith.constant 0 : i32
    %c0_i32_0 = arith.constant 0 : i32
    %c0_i32_1 = arith.constant 0 : i32
    return %arg0, %c0_i32, %c0_i32_0 : i32, i32, i32
  }
}

</mosaic_0001>

<llo_original>
// kernel: tpu_custom_call.1
$region0: #{tpu_custom_call.1}
  #allocation0 [shape = 'u32[]', space=smem, size = 0x4, offset = 0x4, fixed_abs, tag = 'smem constant byte address 0x4 - core index']
  #allocation1 [shape = 'u32[72,128]{1,0:T(1,128)}', space=vmem, size = 0x9000, scoped, tag = 'internal scratch']
  %s0 = inlined_call_operand.hbm [shape: bf16[8,16,256], index: 0, kind: input, shape index: {}]
  %s1 = inlined_call_operand.hbm [shape: f32[16,256], index: 1, kind: input, shape index: {}]
  %s2 = inlined_call_operand.vmem [shape: bf16[256,256], index: 2, kind: input, shape index: {}]
  %s3 = inlined_call_operand.vmem [shape: f32[256,4], index: 3, kind: input, shape index: {}]
  %s4 = inlined_call_operand.hbm [shape: bf16[8,16,256], index: 4, kind: output, shape index: {}]
  %s5 = sld [smem:[#allocation0]]
  $region57: #{tpu_custom_call.1} parent=0
    _
  %s7 = ssub.s32 1, %s5
  %s8 = scalar_select 0, %s7, %s5
  $region1: #{tpu_custom_call.1} parent=0
    #allocation2 [shape = 'u8[65536]{0}', space=vmem, size = 0x10000, scoped, tag = 'input window, operand 0']
    #allocation3 [shape = 's32[2]{0}', space=sflag, size = 0x8, scoped, tag = 'scoped memory for tpu_custom_call.1']
    #allocation4 [shape = 's32[2]{0}', space=sflag, size = 0x8, scoped, tag = 'scoped memory for tpu_custom_call.1']
    #allocation5 [shape = 'u8[16384]{0}', space=vmem, size = 0x4000, scoped, tag = 'input window, operand 1, single buffered']
    #allocation6 [shape = 's32[1]{0}', space=sflag, size = 0x4, scoped, tag = 'scoped memory for tpu_custom_call.1']
    #allocation7 [shape = 'u8[65536]{0}', space=vmem, size = 0x10000, scoped, tag = 'output window, operand 0']
    %9 = vsyncpa [#allocation3], 0
    %s10 = scalar_lea.sflag [#allocation3], 1
    %11 = vsyncpa %s10, 0
    %12 = vsyncpa [#allocation6], 0
    %13 = vsyncpa [#allocation4], 0
    %s14 = scalar_lea.sflag [#allocation4], 1
    %15 = vsyncpa %s14, 0
    loop: start=0, step=1, limit=4
    $region2: #{tpu_custom_call.1} parent=1 // loop_pre_header
      _
    $region3: #{tpu_custom_call.1} parent=1 // loop_header
      %s17 = sphi 0, %s21
      %p18 = scmp.ge.s32.totalorder %s17, 4
      %s27 = sphi 0, %s29
      %s30 = sphi 0, %s27
      %s31 = sphi 0, %s30
      %s47 = sphi 0, %s31
      %s51 = sphi 0, %s51
      %s53 = sphi 0, %s51
      %s54 = sphi 0, %s53
      %s68 = sphi 0, %s54
      %s72 = sphi 0, %s72
      %s74 = sphi 0, %s72
      %s75 = sphi 0, %s74
      %s89 = sphi 0, %s75
      %s93 = sphi 0, %s93
      %s95 = sphi 0, %s93
      %s96 = sphi 0, %s95
      %s110 = sphi 0, %s96
      %s116 = sphi 0, %s118
      %s119 = sphi 0, %s116
      %s120 = sphi 0, %s119
      %s136 = sphi 0, %s120
    $region4: #{tpu_custom_call.1} parent=1 // loop_header_branch
      %20 = sbr.rel (%p18) target = $region8
    $region5: #{tpu_custom_call.1} parent=1 // loop_body
      %s22 = ssub.s32 %s17, 1
      %s23 = ssub.s32 %s17, 2
      %s24 = sadd.s32 %s17, 1
      %s25 = ssub.s32 %s17, %s24
      %p26 = scmp.eq.s32.totalorder %s25, 0
      %s28 = sadd.s32 %s27, 1
      %s29 = scalar_select %p26, %s27, %s28
      %p32 = pneg %p26
      %p33 = scmp.eq.s32.totalorder %s17, 1
      %p34 = por %p32, %p33
      %p35 = scmp.ne.s32.totalorder %s27, %s30
      %p36 = scmp.eq.s32.totalorder %s17, 0
      %p37 = por %p35, %p36
      %p38 = scmp.ne.s32.totalorder %s27, %s30
      %p39 = scmp.eq.s32.totalorder %s22, 1
      %p40 = por %p38, %p39
      %p41 = scmp.ne.s32.totalorder %s30, %s31
      %p42 = scmp.eq.s32.totalorder %s22, 0
      %p43 = por %p41, %p42
      %p44 = scmp.ne.s32.totalorder %s30, %s31
      %p45 = scmp.eq.s32.totalorder %s23, 1
      %p46 = por %p44, %p45
      %p48 = scmp.ne.s32.totalorder %s31, %s47
      %p49 = scmp.eq.s32.totalorder %s23, 0
      %p50 = por %p48, %p49
      %s52 = sadd.s32 %s51, 1
      %p55 = scmp.eq.s32.totalorder %s17, 1
      %p56 = scmp.ne.s32.totalorder %s51, %s53
      %p57 = scmp.eq.s32.totalorder %s17, 0
      %p58 = por %p56, %p57
      %p59 = scmp.ne.s32.totalorder %s51, %s53
      %p60 = scmp.eq.s32.totalorder %s22, 1
      %p61 = por %p59, %p60
      %p62 = scmp.ne.s32.totalorder %s53, %s54
      %p63 = scmp.eq.s32.totalorder %s22, 0
      %p64 = por %p62, %p63
      %p65 = scmp.ne.s32.totalorder %s53, %s54
      %p66 = scmp.eq.s32.totalorder %s23, 1
      %p67 = por %p65, %p66
      %p69 = scmp.ne.s32.totalorder %s54, %s68
      %p70 = scmp.eq.s32.totalorder %s23, 0
      %p71 = por %p69, %p70
      %s73 = sadd.s32 %s72, 1
      %p76 = scmp.eq.s32.totalorder %s17, 1
      %p77 = scmp.ne.s32.totalorder %s72, %s74
      %p78 = scmp.eq.s32.totalorder %s17, 0
      %p79 = por %p77, %p78
      %p80 = scmp.ne.s32.totalorder %s72, %s74
      %p81 = scmp.eq.s32.totalorder %s22, 1
      %p82 = por %p80, %p81
      %p83 = scmp.ne.s32.totalorder %s74, %s75
      %p84 = scmp.eq.s32.totalorder %s22, 0
      %p85 = por %p83, %p84
      %p86 = scmp.ne.s32.totalorder %s74, %s75
      %p87 = scmp.eq.s32.totalorder %s23, 1
      %p88 = por %p86, %p87
      %p90 = scmp.ne.s32.totalorder %s75, %s89
      %p91 = scmp.eq.s32.totalorder %s23, 0
      %p92 = por %p90, %p91
      %s94 = sadd.s32 %s93, 1
      %p97 = scmp.eq.s32.totalorder %s17, 1
      %p98 = scmp.ne.s32.totalorder %s93, %s95
      %p99 = scmp.eq.s32.totalorder %s17, 0
      %p100 = por %p98, %p99
      %p101 = scmp.ne.s32.totalorder %s93, %s95
      %p102 = scmp.eq.s32.totalorder %s22, 1
      %p103 = por %p101, %p102
      %p104 = scmp.ne.s32.totalorder %s95, %s96
      %p105 = scmp.eq.s32.totalorder %s22, 0
      %p106 = por %p104, %p105
      %p107 = scmp.ne.s32.totalorder %s95, %s96
      %p108 = scmp.eq.s32.totalorder %s23, 1
      %p109 = por %p107, %p108
      %p111 = scmp.ne.s32.totalorder %s96, %s110
      %p112 = scmp.eq.s32.totalorder %s23, 0
      %p113 = por %p111, %p112
      %s114 = ssub.s32 %s17, %s24
      %p115 = scmp.eq.s32.totalorder %s114, 0
      %s117 = sadd.s32 %s116, 1
      %s118 = scalar_select %p115, %s116, %s117
      %p121 = pneg %p115
      %p122 = scmp.eq.s32.totalorder %s17, 1
      %p123 = por %p121, %p122
      %p124 = scmp.ne.s32.totalorder %s116, %s119
      %p125 = scmp.eq.s32.totalorder %s17, 0
      %p126 = por %p124, %p125
      %p127 = scmp.ne.s32.totalorder %s116, %s119
      %p128 = scmp.eq.s32.totalorder %s22, 1
      %p129 = por %p127, %p128
      %p130 = scmp.ne.s32.totalorder %s119, %s120
      %p131 = scmp.eq.s32.totalorder %s22, 0
      %p132 = por %p130, %p131
      %p133 = scmp.ne.s32.totalorder %s119, %s120
      %p134 = scmp.eq.s32.totalorder %s23, 1
      %p135 = por %p133, %p134
      %p137 = scmp.ne.s32.totalorder %s120, %s136
      %p138 = scmp.eq.s32.totalorder %s23, 0
      %p139 = por %p137, %p138
      %p140 = scmp.le.s32.totalorder 1, %s17
      %p141 = scmp.lt.s32.totalorder %s17, 3
      %p142 = pnand %p140, %p141
      %p143 = pneg %p142
      // Predicated region
      $region9: #{tpu_custom_call.1} parent=5 // pred_check
        _
      $region10: #{tpu_custom_call.1} parent=5 // pred_check_branch
        %145 = sbr.rel (%p142) target = $region12
      $region11: #{tpu_custom_call.1} parent=5 // pred_region
        %s146 = ssub.s32 %s17, 1
        // Predicated region
        $region13: #{tpu_custom_call.1} parent=11 // pred_check
          %p147 = pneg %p64
        $region14: #{tpu_custom_call.1} parent=11 // pred_check_branch
          %149 = sbr.rel (%p147) target = $region16
        $region15: #{tpu_custom_call.1} parent=11 // pred_region
          %151 = vsyncadd [#allocation6], 0
          %s152 = sshll.u32 %s1, 4
          %s153 = int_to_ptr.hbm [resolvable:$true] %s152
          %s154 = sshll.u32 [#allocation5], 4
          %s155 = int_to_ptr.vmem [resolvable:$true] %s154
          %160 = dma.hbm_to_vmem [thread:$0]  %s153, 512, %s155, [#allocation6], 256, 256, 16
        $region16: #{tpu_custom_call.1} parent=11 // pred_fallthru
          _
        // Predicated region
        $region17: #{tpu_custom_call.1} parent=11 // pred_check
          %p161 = pneg %p85
        $region18: #{tpu_custom_call.1} parent=11 // pred_check_branch
          %163 = sbr.rel (%p161) target = $region20
        $region19: #{tpu_custom_call.1} parent=11 // pred_region
          _
        $region20: #{tpu_custom_call.1} parent=11 // pred_fallthru
          _
        // Predicated region
        $region21: #{tpu_custom_call.1} parent=11 // pred_check
          %p164 = pneg %p106
        $region22: #{tpu_custom_call.1} parent=11 // pred_check_branch
          %166 = sbr.rel (%p164) target = $region24
        $region23: #{tpu_custom_call.1} parent=11 // pred_region
          _
        $region24: #{tpu_custom_call.1} parent=11 // pred_fallthru
          _
      $region12: #{tpu_custom_call.1} parent=5 // pred_fallthru
        _
      %p167 = scmp.lt.s32.totalorder %s17, 2
      // Predicated region
      $region25: #{tpu_custom_call.1} parent=5 // pred_check
        %p168 = pneg %p167
      $region26: #{tpu_custom_call.1} parent=5 // pred_check_branch
        %170 = sbr.rel (%p168) target = $region28
      $region27: #{tpu_custom_call.1} parent=5 // pred_region
        // Predicated region
        $region29: #{tpu_custom_call.1} parent=27 // pred_check
          %p171 = pneg %p37
        $region30: #{tpu_custom_call.1} parent=27 // pred_check_branch
          %173 = sbr.rel (%p171) target = $region32
        $region31: #{tpu_custom_call.1} parent=27 // pred_region
          %s174 = sand.u32 %s27, 1
          %s175 = scalar_lea.sflag [#allocation3], %s174
          %s176 = sand.u32 %s27, 1
          %s177 = smul.addr %s176, 64
          %s178 = scalar_lea.vmem [#allocation2], %s177
          %s179 = smul.u32 4, %s17
          %181 = vsyncadd %s175, 0
          %s182 = smul.addr %s179, 4
          %s183 = smul.addr %s182, 4
          %s184 = scalar_lea.hbm %s0, %s183
          %s185 = sshll.u32 %s184, 4
          %s186 = int_to_ptr.hbm [resolvable:$true] %s185
          %s187 = sshll.u32 %s178, 4
          %s188 = int_to_ptr.vmem [resolvable:$true] %s187
          %193 = dma.hbm_to_vmem [thread:$0]  %s186, 1024, %s188, %s175, 128, 128, 8
        $region32: #{tpu_custom_call.1} parent=27 // pred_fallthru
          _
      $region28: #{tpu_custom_call.1} parent=5 // pred_fallthru
        _
      %p194 = scmp.le.s32.totalorder 1, %s17
      %p195 = scmp.lt.s32.totalorder %s17, 3
      %p196 = pnand %p194, %p195
      %p197 = pneg %p196
      // Predicated region
      $region33: #{tpu_custom_call.1} parent=5 // pred_check
        _
      $region34: #{tpu_custom_call.1} parent=5 // pred_check_branch
        %199 = sbr.rel (%p196) target = $region36
      $region35: #{tpu_custom_call.1} parent=5 // pred_region
        %s200 = ssub.s32 %s17, 1
        %s201 = sand.u32 %s30, 1
        %s202 = scalar_lea.sflag [#allocation3], %s201
        %s203 = sand.u32 %s30, 1
        %s204 = smul.addr %s203, 64
        %s205 = scalar_lea.vmem [#allocation2], %s204
        // Predicated region
        $region37: #{tpu_custom_call.1} parent=35 // pred_check
          %p206 = pneg %p43
        $region38: #{tpu_custom_call.1} parent=35 // pred_check_branch
          %208 = sbr.rel (%p206) target = $region40
        $region39: #{tpu_custom_call.1} parent=35 // pred_region
          %210 = dma.done %s202, 1024
        $region40: #{tpu_custom_call.1} parent=35 // pred_fallthru
          _
        // Predicated region
        $region41: #{tpu_custom_call.1} parent=35 // pred_check
          %p211 = pneg %p64
        $region42: #{tpu_custom_call.1} parent=35 // pred_check_branch
          %213 = sbr.rel (%p211) target = $region44
        $region43: #{tpu_custom_call.1} parent=35 // pred_region
          %215 = dma.done [#allocation6], 512
        $region44: #{tpu_custom_call.1} parent=35 // pred_fallthru
          _
        %s216 = sand.u32 %s30, 1
        %s217 = scalar_lea.sflag [#allocation3], %s216
        %s218 = sand.u32 %s30, 1
        %s219 = smul.addr %s218, 64
        %s220 = scalar_lea.vmem [#allocation2], %s219
        %p221 = pneg %p43
        %p222 = pneg %p40
        %p223 = pneg %p64
        %p224 = pneg %p61
        %p225 = pneg %p85
        %p226 = pneg %p82
        %p227 = pneg %p106
        %p228 = pneg %p103
        %p229 = pneg %p132
        %p230 = pneg %p129
        %s231 = sand.u32 %s119, 1
        %s232 = scalar_lea.sflag [#allocation4], %s231
        %s233 = sand.u32 %s119, 1
        %s234 = smul.addr %s233, 64
        %s235 = scalar_lea.vmem [#allocation7], %s234
        %s236 = smul.u32 4, %s22
        %s237 = smul.u32 4, %s22
        %v238 = vld [vmem:[%s205] sm:$0xff]
        %v239 = vld [vmem:[%s205 + $0x8] sm:$0xff]
        %v240 = vld [vmem:[%s205 + $0x10] sm:$0xff]
        %v241 = vld [vmem:[%s205 + $0x18] sm:$0xff]
        %v242 = vld [vmem:[%s205 + $0x20] sm:$0xff]
        %v243 = vld [vmem:[%s205 + $0x28] sm:$0xff]
        %v244 = vld [vmem:[%s205 + $0x30] sm:$0xff]
        %v245 = vld [vmem:[%s205 + $0x38] sm:$0xff]
        %v246 = vunpack.c.l.bf16 %v238
        %v247 = vunpack.c.h.bf16 %v238
        %v248 = vunpack.c.l.bf16 %v239
        %v249 = vunpack.c.h.bf16 %v239
        %v250 = vunpack.c.l.bf16 %v240
        %v251 = vunpack.c.h.bf16 %v240
        %v252 = vunpack.c.l.bf16 %v241
        %v253 = vunpack.c.h.bf16 %v241
        %v254 = vunpack.c.l.bf16 %v242
        %v255 = vunpack.c.h.bf16 %v242
        %v256 = vunpack.c.l.bf16 %v243
        %v257 = vunpack.c.h.bf16 %v243
        %v258 = vunpack.c.l.bf16 %v244
        %v259 = vunpack.c.h.bf16 %v244
        %v260 = vunpack.c.l.bf16 %v245
        %v261 = vunpack.c.h.bf16 %v245
        %v262 = vlaneseq
        %v263 = vshrl.u32 %v262, 7
        %v264 = vadd.s32 %v263, 8
        %v265 = vadd.s32 %v263, 16
        %v266 = vadd.s32 %v263, 24
        %v267 = vadd.s32 %v263, 32
        %v268 = vadd.s32 %v263, 40
        %v269 = vadd.s32 %v263, 48
        %v270 = vadd.s32 %v263, 56
        %v271 = vlaneseq
        %v272 = vand.u32 %v271, 127
        %v273 = vadd.s32 %v272, 128
        %vm274 = vcmp.lt.s32.totalorder %v263, 0
        %v275 = vsub.s32 0, %v263
        %v276 = vsel %vm274, %v275, %v263
        %v277 = vshrl.u32 %v276, 4
        %v278 = vand.u32 %v276, 15
        %v279 = vsub.s32 0, %v278
        %v280 = vsel %vm274, %v279, %v278
        %vm281 = vcmp.lt.s32.totalorder %v264, 0
        %v282 = vsub.s32 0, %v264
        %v283 = vsel %vm281, %v282, %v264
        %v284 = vshrl.u32 %v283, 4
        %v285 = vand.u32 %v283, 15
        %v286 = vsub.s32 0, %v285
        %v287 = vsel %vm281, %v286, %v285
        %vm288 = vcmp.lt.s32.totalorder %v265, 0
        %v289 = vsub.s32 0, %v265
        %v290 = vsel %vm288, %v289, %v265
        %v291 = vshrl.u32 %v290, 4
        %v292 = vand.u32 %v290, 15
        %v293 = vsub.s32 0, %v292
        %v294 = vsel %vm288, %v293, %v292
        %vm295 = vcmp.lt.s32.totalorder %v266, 0
        %v296 = vsub.s32 0, %v266
        %v297 = vsel %vm295, %v296, %v266
        %v298 = vshrl.u32 %v297, 4
        %v299 = vand.u32 %v297, 15
        %v300 = vsub.s32 0, %v299
        %v301 = vsel %vm295, %v300, %v299
        %vm302 = vcmp.lt.s32.totalorder %v267, 0
        %v303 = vsub.s32 0, %v267
        %v304 = vsel %vm302, %v303, %v267
        %v305 = vshrl.u32 %v304, 4
        %v306 = vand.u32 %v304, 15
        %v307 = vsub.s32 0, %v306
        %v308 = vsel %vm302, %v307, %v306
        %vm309 = vcmp.lt.s32.totalorder %v268, 0
        %v310 = vsub.s32 0, %v268
        %v311 = vsel %vm309, %v310, %v268
        %v312 = vshrl.u32 %v311, 4
        %v313 = vand.u32 %v311, 15
        %v314 = vsub.s32 0, %v313
        %v315 = vsel %vm309, %v314, %v313
        %vm316 = vcmp.lt.s32.totalorder %v269, 0
        %v317 = vsub.s32 0, %v269
        %v318 = vsel %vm316, %v317, %v269
        %v319 = vshrl.u32 %v318, 4
        %v320 = vand.u32 %v318, 15
        %v321 = vsub.s32 0, %v320
        %v322 = vsel %vm316, %v321, %v320
        %vm323 = vcmp.lt.s32.totalorder %v270, 0
        %v324 = vsub.s32 0, %v270
        %v325 = vsel %vm323, %v324, %v270
        %v326 = vshrl.u32 %v325, 4
        %v327 = vand.u32 %v325, 15
        %v328 = vsub.s32 0, %v327
        %v329 = vsel %vm323, %v328, %v327
        %vm330 = vcmp.ne.s32.totalorder %v280, 0
        %vm331 = vcmp.ne.s32.totalorder %v287, 0
        %vm332 = vcmp.ne.s32.totalorder %v294, 0
        %vm333 = vcmp.ne.s32.totalorder %v301, 0
        %vm334 = vcmp.ne.s32.totalorder %v308, 0
        %vm335 = vcmp.ne.s32.totalorder %v315, 0
        %vm336 = vcmp.ne.s32.totalorder %v322, 0
        %vm337 = vcmp.ne.s32.totalorder %v329, 0
        %vm338 = vcmp.lt.s32.totalorder %v280, 0
        %vm339 = vcmp.lt.s32.totalorder %v287, 0
        %vm340 = vcmp.lt.s32.totalorder %v294, 0
        %vm341 = vcmp.lt.s32.totalorder %v301, 0
        %vm342 = vcmp.lt.s32.totalorder %v308, 0
        %vm343 = vcmp.lt.s32.totalorder %v315, 0
        %vm344 = vcmp.lt.s32.totalorder %v322, 0
        %vm345 = vcmp.lt.s32.totalorder %v329, 0
        %vm346 = vmand %vm338, %vm330
        %vm347 = vmand %vm339, %vm331
        %vm348 = vmand %vm340, %vm332
        %vm349 = vmand %vm341, %vm333
        %vm350 = vmand %vm342, %vm334
        %vm351 = vmand %vm343, %vm335
        %vm352 = vmand %vm344, %vm336
        %vm353 = vmand %vm345, %vm337
        %v354 = vadd.s32 %v280, 16
        %v355 = vadd.s32 %v287, 16
        %v356 = vadd.s32 %v294, 16
        %v357 = vadd.s32 %v301, 16
        %v358 = vadd.s32 %v308, 16
        %v359 = vadd.s32 %v315, 16
        %v360 = vadd.s32 %v322, 16
        %v361 = vadd.s32 %v329, 16
        %v362 = vsel %vm346, %v354, %v280
        %v363 = vsel %vm347, %v355, %v287
        %v364 = vsel %vm348, %v356, %v294
        %v365 = vsel %vm349, %v357, %v301
        %v366 = vsel %vm350, %v358, %v308
        %v367 = vsel %vm351, %v359, %v315
        %v368 = vsel %vm352, %v360, %v322
        %v369 = vsel %vm353, %v361, %v329
        %vm370 = vcmp.lt.s32.totalorder %v362, 15
        %vm371 = vcmp.lt.s32.totalorder %v363, 15
        %vm372 = vcmp.lt.s32.totalorder %v364, 15
        %vm373 = vcmp.lt.s32.totalorder %v365, 15
        %vm374 = vcmp.lt.s32.totalorder %v366, 15
        %vm375 = vcmp.lt.s32.totalorder %v367, 15
        %vm376 = vcmp.lt.s32.totalorder %v368, 15
        %vm377 = vcmp.lt.s32.totalorder %v369, 15
        %vm378 = vcmp.ge.s32.totalorder %v362, 1
        %vm379 = vcmp.ge.s32.totalorder %v363, 1
        %vm380 = vcmp.ge.s32.totalorder %v364, 1
        %vm381 = vcmp.ge.s32.totalorder %v365, 1
        %vm382 = vcmp.ge.s32.totalorder %v366, 1
        %vm383 = vcmp.ge.s32.totalorder %v367, 1
        %vm384 = vcmp.ge.s32.totalorder %v368, 1
        %vm385 = vcmp.ge.s32.totalorder %v369, 1
        %vm386 = vcmp.lt.s32.totalorder %v272, 240
        %vm387 = vcmp.lt.s32.totalorder %v273, 240
        %vm388 = vcmp.ge.s32.totalorder %v272, 16
        %vm389 = vcmp.ge.s32.totalorder %v273, 16
        %v390 = vrot.slane %v246, 7
        %v391 = vrot.slane %v247, 7
        %v392 = vrot.slane %v248, 7
        %v393 = vrot.slane %v249, 7
        %v394 = vrot.slane %v250, 7
        %v395 = vrot.slane %v251, 7
        %v396 = vrot.slane %v252, 7
        %v397 = vrot.slane %v253, 7
        %v398 = vrot.slane %v254, 7
        %v399 = vrot.slane %v255, 7
        %v400 = vrot.slane %v256, 7
        %v401 = vrot.slane %v257, 7
        %v402 = vrot.slane %v258, 7
        %v403 = vrot.slane %v259, 7
        %v404 = vrot.slane %v260, 7
        %v405 = vrot.slane %v261, 7
        %vm406 = vcmp.lt.s32.totalorder %v263, 1
        %v407 = vsel %vm406, %v402, %v404
        %v408 = vsel %vm406, %v403, %v405
        %v409 = vsel %vm406, %v400, %v402
        %v410 = vsel %vm406, %v401, %v403
        %v411 = vsel %vm406, %v398, %v400
        %v412 = vsel %vm406, %v399, %v401
        %v413 = vsel %vm406, %v396, %v398
        %v414 = vsel %vm406, %v397, %v399
        %v415 = vsel %vm406, %v394, %v396
        %v416 = vsel %vm406, %v395, %v397
        %v417 = vsel %vm406, %v392, %v394
        %v418 = vsel %vm406, %v393, %v395
        %v419 = vsel %vm406, %v390, %v392
        %v420 = vsel %vm406, %v391, %v393
        %v421 = vsel %vm406, %v404, %v390
        %v422 = vsel %vm406, %v405, %v391
        %v423 = vsel %vm378, %v421, 0.0
        %v424 = vsel %vm378, %v422, 0.0
        %v425 = vsel %vm379, %v419, 0.0
        %v426 = vsel %vm379, %v420, 0.0
        %v427 = vsel %vm380, %v417, 0.0
        %v428 = vsel %vm380, %v418, 0.0
        %v429 = vsel %vm381, %v415, 0.0
        %v430 = vsel %vm381, %v416, 0.0
        %v431 = vsel %vm382, %v413, 0.0
        %v432 = vsel %vm382, %v414, 0.0
        %v433 = vsel %vm383, %v411, 0.0
        %v434 = vsel %vm383, %v412, 0.0
        %v435 = vsel %vm384, %v409, 0.0
        %v436 = vsel %vm384, %v410, 0.0
        %v437 = vsel %vm385, %v407, 0.0
        %v438 = vsel %vm385, %v408, 0.0
        %v439 = vrot.slane %v246, 1
        %v440 = vrot.slane %v247, 1
        %v441 = vrot.slane %v248, 1
        %v442 = vrot.slane %v249, 1
        %v443 = vrot.slane %v250, 1
        %v444 = vrot.slane %v251, 1
        %v445 = vrot.slane %v252, 1
        %v446 = vrot.slane %v253, 1
        %v447 = vrot.slane %v254, 1
        %v448 = vrot.slane %v255, 1
        %v449 = vrot.slane %v256, 1
        %v450 = vrot.slane %v257, 1
        %v451 = vrot.slane %v258, 1
        %v452 = vrot.slane %v259, 1
        %v453 = vrot.slane %v260, 1
        %v454 = vrot.slane %v261, 1
        %vm455 = vcmp.lt.s32.totalorder %v263, 7
        %v456 = vsel %vm455, %v451, %v453
        %v457 = vsel %vm455, %v452, %v454
        %v458 = vsel %vm455, %v449, %v451
        %v459 = vsel %vm455, %v450, %v452
        %v460 = vsel %vm455, %v447, %v449
        %v461 = vsel %vm455, %v448, %v450
        %v462 = vsel %vm455, %v445, %v447
        %v463 = vsel %vm455, %v446, %v448
        %v464 = vsel %vm455, %v443, %v445
        %v465 = vsel %vm455, %v444, %v446
        %v466 = vsel %vm455, %v441, %v443
        %v467 = vsel %vm455, %v442, %v444
        %v468 = vsel %vm455, %v439, %v441
        %v469 = vsel %vm455, %v440, %v442
        %v470 = vsel %vm455, %v453, %v439
        %v471 = vsel %vm455, %v454, %v440
        %v472 = vsel %vm370, %v468, 0.0
        %v473 = vsel %vm370, %v469, 0.0
        %v474 = vsel %vm371, %v466, 0.0
        %v475 = vsel %vm371, %v467, 0.0
        %v476 = vsel %vm372, %v464, 0.0
        %v477 = vsel %vm372, %v465, 0.0
        %v478 = vsel %vm373, %v462, 0.0
        %v479 = vsel %vm373, %v463, 0.0
        %v480 = vsel %vm374, %v460, 0.0
        %v481 = vsel %vm374, %v461, 0.0
        %v482 = vsel %vm375, %v458, 0.0
        %v483 = vsel %vm375, %v459, 0.0
        %v484 = vsel %vm376, %v456, 0.0
        %v485 = vsel %vm376, %v457, 0.0
        %v486 = vsel %vm377, %v470, 0.0
        %v487 = vsel %vm377, %v471, 0.0
        %488 = vrot.lane.b32.xlu0 %v423, 16
        %v489 = vpop.permute.xlu0 %488
        %490 = vrot.lane.b32.xlu0 %v425, 16
        %v491 = vpop.permute.xlu0 %490
        %492 = vrot.lane.b32.xlu0 %v427, 16
        %v493 = vpop.permute.xlu0 %492
        %494 = vrot.lane.b32.xlu0 %v429, 16
        %v495 = vpop.permute.xlu0 %494
        %496 = vrot.lane.b32.xlu0 %v431, 16
        %v497 = vpop.permute.xlu0 %496
        %498 = vrot.lane.b32.xlu0 %v433, 16
        %v499 = vpop.permute.xlu0 %498
        %500 = vrot.lane.b32.xlu0 %v435, 16
        %v501 = vpop.permute.xlu0 %500
        %502 = vrot.lane.b32.xlu0 %v437, 16
        %v503 = vpop.permute.xlu0 %502
        %504 = vrot.lane.b32.xlu0 %v424, 16
        %v505 = vpop.permute.xlu0 %504
        %506 = vrot.lane.b32.xlu0 %v426, 16
        %v507 = vpop.permute.xlu0 %506
        %508 = vrot.lane.b32.xlu0 %v428, 16
        %v509 = vpop.permute.xlu0 %508
        %510 = vrot.lane.b32.xlu0 %v430, 16
        %v511 = vpop.permute.xlu0 %510
        %512 = vrot.lane.b32.xlu0 %v432, 16
        %v513 = vpop.permute.xlu0 %512
        %514 = vrot.lane.b32.xlu0 %v434, 16
        %v515 = vpop.permute.xlu0 %514
        %516 = vrot.lane.b32.xlu0 %v436, 16
        %v517 = vpop.permute.xlu0 %516
        %518 = vrot.lane.b32.xlu0 %v438, 16
        %v519 = vpop.permute.xlu0 %518
        %vm520 = vcmp.lt.s32.totalorder %v272, 16
        %v521 = vsel %vm520, %v489, %v505
        %v522 = vsel %vm520, %v491, %v507
        %v523 = vsel %vm520, %v493, %v509
        %v524 = vsel %vm520, %v495, %v511
        %v525 = vsel %vm520, %v497, %v513
        %v526 = vsel %vm520, %v499, %v515
        %v527 = vsel %vm520, %v501, %v517
        %v528 = vsel %vm520, %v503, %v519
        %v529 = vsel %vm520, %v505, %v489
        %v530 = vsel %vm520, %v507, %v491
        %v531 = vsel %vm520, %v509, %v493
        %v532 = vsel %vm520, %v511, %v495
        %v533 = vsel %vm520, %v513, %v497
        %v534 = vsel %vm520, %v515, %v499
        %v535 = vsel %vm520, %v517, %v501
        %v536 = vsel %vm520, %v519, %v503
        %v537 = vsel %vm388, %v529, 0.0
        %v538 = vsel %vm389, %v521, 0.0
        %v539 = vsel %vm388, %v530, 0.0
        %v540 = vsel %vm389, %v522, 0.0
        %v541 = vsel %vm388, %v531, 0.0
        %v542 = vsel %vm389, %v523, 0.0
        %v543 = vsel %vm388, %v532, 0.0
        %v544 = vsel %vm389, %v524, 0.0
        %v545 = vsel %vm388, %v533, 0.0
        %v546 = vsel %vm389, %v525, 0.0
        %v547 = vsel %vm388, %v534, 0.0
        %v548 = vsel %vm389, %v526, 0.0
        %v549 = vsel %vm388, %v535, 0.0
        %v550 = vsel %vm389, %v527, 0.0
        %v551 = vsel %vm388, %v536, 0.0
        %v552 = vsel %vm389, %v528, 0.0
        %v553 = vld [vmem:[#allocation5] ss:$8 sm:$0x3]
        %v555 = vperm.slane %v553, 0
        %v556 = vperm.slane %v553, 1
        %v559 = vmul.f32 %v537, %v555
        %v560 = vmul.f32 %v538, %v556
        %v561 = vmul.f32 %v539, %v555
        %v562 = vmul.f32 %v540, %v556
        %v563 = vmul.f32 %v541, %v555
        %v564 = vmul.f32 %v542, %v556
        %v565 = vmul.f32 %v543, %v555
        %v566 = vmul.f32 %v544, %v556
        %v567 = vmul.f32 %v545, %v555
        %v568 = vmul.f32 %v546, %v556
        %v569 = vmul.f32 %v547, %v555
        %v570 = vmul.f32 %v548, %v556
        %v571 = vmul.f32 %v549, %v555
        %v572 = vmul.f32 %v550, %v556
        %v573 = vmul.f32 %v551, %v555
        %v574 = vmul.f32 %v552, %v556
        %v575 = vadd.f32 %v559, 0.0
        %v576 = vadd.f32 %v560, 0.0
        %v577 = vadd.f32 %v561, 0.0
        %v578 = vadd.f32 %v562, 0.0
        %v579 = vadd.f32 %v563, 0.0
        %v580 = vadd.f32 %v564, 0.0
        %v581 = vadd.f32 %v565, 0.0
        %v582 = vadd.f32 %v566, 0.0
        %v583 = vadd.f32 %v567, 0.0
        %v584 = vadd.f32 %v568, 0.0
        %v585 = vadd.f32 %v569, 0.0
        %v586 = vadd.f32 %v570, 0.0
        %v587 = vadd.f32 %v571, 0.0
        %v588 = vadd.f32 %v572, 0.0
        %v589 = vadd.f32 %v573, 0.0
        %v590 = vadd.f32 %v574, 0.0
        %s591 = scalar_lea.vmem [#allocation5], 1
        %v592 = vld [vmem:[%s591] ss:$8 sm:$0x3]
        %v594 = vperm.slane %v592, 0
        %v595 = vperm.slane %v592, 1
        %v598 = vmul.f32 %v423, %v594
        %v599 = vmul.f32 %v424, %v595
        %v600 = vmul.f32 %v425, %v594
        %v601 = vmul.f32 %v426, %v595
        %v602 = vmul.f32 %v427, %v594
        %v603 = vmul.f32 %v428, %v595
        %v604 = vmul.f32 %v429, %v594
        %v605 = vmul.f32 %v430, %v595
        %v606 = vmul.f32 %v431, %v594
        %v607 = vmul.f32 %v432, %v595
        %v608 = vmul.f32 %v433, %v594
        %v609 = vmul.f32 %v434, %v595
        %v610 = vmul.f32 %v435, %v594
        %v611 = vmul.f32 %v436, %v595
        %v612 = vmul.f32 %v437, %v594
        %v613 = vmul.f32 %v438, %v595
        %v614 = vadd.f32 %v575, %v598
        %v615 = vadd.f32 %v576, %v599
        %v616 = vadd.f32 %v577, %v600
        %v617 = vadd.f32 %v578, %v601
        %v618 = vadd.f32 %v579, %v602
        %v619 = vadd.f32 %v580, %v603
        %v620 = vadd.f32 %v581, %v604
        %v621 = vadd.f32 %v582, %v605
        %v622 = vadd.f32 %v583, %v606
        %v623 = vadd.f32 %v584, %v607
        %v624 = vadd.f32 %v585, %v608
        %v625 = vadd.f32 %v586, %v609
        %v626 = vadd.f32 %v587, %v610
        %v627 = vadd.f32 %v588, %v611
        %v628 = vadd.f32 %v589, %v612
        %v629 = vadd.f32 %v590, %v613
        %630 = vrot.lane.b32.xlu0 %v423, 112
        %v631 = vpop.permute.xlu0 %630
        %632 = vrot.lane.b32.xlu0 %v425, 112
        %v633 = vpop.permute.xlu0 %632
        %634 = vrot.lane.b32.xlu0 %v427, 112
        %v635 = vpop.permute.xlu0 %634
        %636 = vrot.lane.b32.xlu0 %v429, 112
        %v637 = vpop.permute.xlu0 %636
        %638 = vrot.lane.b32.xlu0 %v431, 112
        %v639 = vpop.permute.xlu0 %638
        %640 = vrot.lane.b32.xlu0 %v433, 112
        %v641 = vpop.permute.xlu0 %640
        %642 = vrot.lane.b32.xlu0 %v435, 112
        %v643 = vpop.permute.xlu0 %642
        %644 = vrot.lane.b32.xlu0 %v437, 112
        %v645 = vpop.permute.xlu0 %644
        %646 = vrot.lane.b32.xlu0 %v424, 112
        %v647 = vpop.permute.xlu0 %646
        %648 = vrot.lane.b32.xlu0 %v426, 112
        %v649 = vpop.permute.xlu0 %648
        %650 = vrot.lane.b32.xlu0 %v428, 112
        %v651 = vpop.permute.xlu0 %650
        %652 = vrot.lane.b32.xlu0 %v430, 112
        %v653 = vpop.permute.xlu0 %652
        %654 = vrot.lane.b32.xlu0 %v432, 112
        %v655 = vpop.permute.xlu0 %654
        %656 = vrot.lane.b32.xlu0 %v434, 112
        %v657 = vpop.permute.xlu0 %656
        %658 = vrot.lane.b32.xlu0 %v436, 112
        %v659 = vpop.permute.xlu0 %658
        %660 = vrot.lane.b32.xlu0 %v438, 112
        %v661 = vpop.permute.xlu0 %660
        %vm662 = vcmp.lt.s32.totalorder %v272, 112
        %v663 = vsel %vm662, %v631, %v647
        %v664 = vsel %vm662, %v633, %v649
        %v665 = vsel %vm662, %v635, %v651
        %v666 = vsel %vm662, %v637, %v653
        %v667 = vsel %vm662, %v639, %v655
        %v668 = vsel %vm662, %v641, %v657
        %v669 = vsel %vm662, %v643, %v659
        %v670 = vsel %vm662, %v645, %v661
        %v671 = vsel %vm662, %v647, %v631
        %v672 = vsel %vm662, %v649, %v633
        %v673 = vsel %vm662, %v651, %v635
        %v674 = vsel %vm662, %v653, %v637
        %v675 = vsel %vm662, %v655, %v639
        %v676 = vsel %vm662, %v657, %v641
        %v677 = vsel %vm662, %v659, %v643
        %v678 = vsel %vm662, %v661, %v645
        %v679 = vsel %vm386, %v663, 0.0
        %v680 = vsel %vm387, %v671, 0.0
        %v681 = vsel %vm386, %v664, 0.0
        %v682 = vsel %vm387, %v672, 0.0
        %v683 = vsel %vm386, %v665, 0.0
        %v684 = vsel %vm387, %v673, 0.0
        %v685 = vsel %vm386, %v666, 0.0
        %v686 = vsel %vm387, %v674, 0.0
        %v687 = vsel %vm386, %v667, 0.0
        %v688 = vsel %vm387, %v675, 0.0
        %v689 = vsel %vm386, %v668, 0.0
        %v690 = vsel %vm387, %v676, 0.0
        %v691 = vsel %vm386, %v669, 0.0
        %v692 = vsel %vm387, %v677, 0.0
        %v693 = vsel %vm386, %v670, 0.0
        %v694 = vsel %vm387, %v678, 0.0
        %s695 = scalar_lea.vmem [#allocation5], 2
        %v696 = vld [vmem:[%s695] ss:$8 sm:$0x3]
        %v698 = vperm.slane %v696, 0
        %v699 = vperm.slane %v696, 1
        %v702 = vmul.f32 %v679, %v698
        %v703 = vmul.f32 %v680, %v699
        %v704 = vmul.f32 %v681, %v698
        %v705 = vmul.f32 %v682, %v699
        %v706 = vmul.f32 %v683, %v698
        %v707 = vmul.f32 %v684, %v699
        %v708 = vmul.f32 %v685, %v698
        %v709 = vmul.f32 %v686, %v699
        %v710 = vmul.f32 %v687, %v698
        %v711 = vmul.f32 %v688, %v699
        %v712 = vmul.f32 %v689, %v698
        %v713 = vmul.f32 %v690, %v699
        %v714 = vmul.f32 %v691, %v698
        %v715 = vmul.f32 %v692, %v699
        %v716 = vmul.f32 %v693, %v698
        %v717 = vmul.f32 %v694, %v699
        %v718 = vadd.f32 %v614, %v702
        %v719 = vadd.f32 %v615, %v703
        %v720 = vadd.f32 %v616, %v704
        %v721 = vadd.f32 %v617, %v705
        %v722 = vadd.f32 %v618, %v706
        %v723 = vadd.f32 %v619, %v707
        %v724 = vadd.f32 %v620, %v708
        %v725 = vadd.f32 %v621, %v709
        %v726 = vadd.f32 %v622, %v710
        %v727 = vadd.f32 %v623, %v711
        %v728 = vadd.f32 %v624, %v712
        %v729 = vadd.f32 %v625, %v713
        %v730 = vadd.f32 %v626, %v714
        %v731 = vadd.f32 %v627, %v715
        %v732 = vadd.f32 %v628, %v716
        %v733 = vadd.f32 %v629, %v717
        %734 = vrot.lane.b32.xlu0 %v246, 16
        %v735 = vpop.permute.xlu0 %734
        %736 = vrot.lane.b32.xlu0 %v248, 16
        %v737 = vpop.permute.xlu0 %736
        %738 = vrot.lane.b32.xlu0 %v250, 16
        %v739 = vpop.permute.xlu0 %738
        %740 = vrot.lane.b32.xlu0 %v252, 16
        %v741 = vpop.permute.xlu0 %740
        %742 = vrot.lane.b32.xlu0 %v254, 16
        %v743 = vpop.permute.xlu0 %742
        %744 = vrot.lane.b32.xlu0 %v256, 16
        %v745 = vpop.permute.xlu0 %744
        %746 = vrot.lane.b32.xlu0 %v258, 16
        %v747 = vpop.permute.xlu0 %746
        %748 = vrot.lane.b32.xlu0 %v260, 16
        %v749 = vpop.permute.xlu0 %748
        %750 = vrot.lane.b32.xlu0 %v247, 16
        %v751 = vpop.permute.xlu0 %750
        %752 = vrot.lane.b32.xlu0 %v249, 16
        %v753 = vpop.permute.xlu0 %752
        %754 = vrot.lane.b32.xlu0 %v251, 16
        %v755 = vpop.permute.xlu0 %754
        %756 = vrot.lane.b32.xlu0 %v253, 16
        %v757 = vpop.permute.xlu0 %756
        %758 = vrot.lane.b32.xlu0 %v255, 16
        %v759 = vpop.permute.xlu0 %758
        %760 = vrot.lane.b32.xlu0 %v257, 16
        %v761 = vpop.permute.xlu0 %760
        %762 = vrot.lane.b32.xlu0 %v259, 16
        %v763 = vpop.permute.xlu0 %762
        %764 = vrot.lane.b32.xlu0 %v261, 16
        %v765 = vpop.permute.xlu0 %764
        %v766 = vsel %vm520, %v735, %v751
        %v767 = vsel %vm520, %v737, %v753
        %v768 = vsel %vm520, %v739, %v755
        %v769 = vsel %vm520, %v741, %v757
        %v770 = vsel %vm520, %v743, %v759
        %v771 = vsel %vm520, %v745, %v761
        %v772 = vsel %vm520, %v747, %v763
        %v773 = vsel %vm520, %v749, %v765
        %v774 = vsel %vm520, %v751, %v735
        %v775 = vsel %vm520, %v753, %v737
        %v776 = vsel %vm520, %v755, %v739
        %v777 = vsel %vm520, %v757, %v741
        %v778 = vsel %vm520, %v759, %v743
        %v779 = vsel %vm520, %v761, %v745
        %v780 = vsel %vm520, %v763, %v747
        %v781 = vsel %vm520, %v765, %v749
        %v782 = vsel %vm388, %v774, 0.0
        %v783 = vsel %vm389, %v766, 0.0
        %v784 = vsel %vm388, %v775, 0.0
        %v785 = vsel %vm389, %v767, 0.0
        %v786 = vsel %vm388, %v776, 0.0
        %v787 = vsel %vm389, %v768, 0.0
        %v788 = vsel %vm388, %v777, 0.0
        %v789 = vsel %vm389, %v769, 0.0
        %v790 = vsel %vm388, %v778, 0.0
        %v791 = vsel %vm389, %v770, 0.0
        %v792 = vsel %vm388, %v779, 0.0
        %v793 = vsel %vm389, %v771, 0.0
        %v794 = vsel %vm388, %v780, 0.0
        %v795 = vsel %vm389, %v772, 0.0
        %v796 = vsel %vm388, %v781, 0.0
        %v797 = vsel %vm389, %v773, 0.0
        %s798 = scalar_lea.vmem [#allocation5], 3
        %v799 = vld [vmem:[%s798] ss:$8 sm:$0x3]
        %v801 = vperm.slane %v799, 0
        %v802 = vperm.slane %v799, 1
        %v805 = vmul.f32 %v782, %v801
        %v806 = vmul.f32 %v783, %v802
        %v807 = vmul.f32 %v784, %v801
        %v808 = vmul.f32 %v785, %v802
        %v809 = vmul.f32 %v786, %v801
        %v810 = vmul.f32 %v787, %v802
        %v811 = vmul.f32 %v788, %v801
        %v812 = vmul.f32 %v789, %v802
        %v813 = vmul.f32 %v790, %v801
        %v814 = vmul.f32 %v791, %v802
        %v815 = vmul.f32 %v792, %v801
        %v816 = vmul.f32 %v793, %v802
        %v817 = vmul.f32 %v794, %v801
        %v818 = vmul.f32 %v795, %v802
        %v819 = vmul.f32 %v796, %v801
        %v820 = vmul.f32 %v797, %v802
        %v821 = vadd.f32 %v718, %v805
        %v822 = vadd.f32 %v719, %v806
        %v823 = vadd.f32 %v720, %v807
        %v824 = vadd.f32 %v721, %v808
        %v825 = vadd.f32 %v722, %v809
        %v826 = vadd.f32 %v723, %v810
        %v827 = vadd.f32 %v724, %v811
        %v828 = vadd.f32 %v725, %v812
        %v829 = vadd.f32 %v726, %v813
        %v830 = vadd.f32 %v727, %v814
        %v831 = vadd.f32 %v728, %v815
        %v832 = vadd.f32 %v729, %v816
        %v833 = vadd.f32 %v730, %v817
        %v834 = vadd.f32 %v731, %v818
        %v835 = vadd.f32 %v732, %v819
        %v836 = vadd.f32 %v733, %v820
        %s837 = scalar_lea.vmem [#allocation5], 4
        %v838 = vld [vmem:[%s837] ss:$8 sm:$0x3]
        %v840 = vperm.slane %v838, 0
        %v841 = vperm.slane %v838, 1
        %v844 = vmul.f32 %v246, %v840
        %v845 = vmul.f32 %v247, %v841
        %v846 = vmul.f32 %v248, %v840
        %v847 = vmul.f32 %v249, %v841
        %v848 = vmul.f32 %v250, %v840
        %v849 = vmul.f32 %v251, %v841
        %v850 = vmul.f32 %v252, %v840
        %v851 = vmul.f32 %v253, %v841
        %v852 = vmul.f32 %v254, %v840
        %v853 = vmul.f32 %v255, %v841
        %v854 = vmul.f32 %v256, %v840
        %v855 = vmul.f32 %v257, %v841
        %v856 = vmul.f32 %v258, %v840
        %v857 = vmul.f32 %v259, %v841
        %v858 = vmul.f32 %v260, %v840
        %v859 = vmul.f32 %v261, %v841
        %v860 = vadd.f32 %v821, %v844
        %v861 = vadd.f32 %v822, %v845
        %v862 = vadd.f32 %v823, %v846
        %v863 = vadd.f32 %v824, %v847
        %v864 = vadd.f32 %v825, %v848
        %v865 = vadd.f32 %v826, %v849
        %v866 = vadd.f32 %v827, %v850
        %v867 = vadd.f32 %v828, %v851
        %v868 = vadd.f32 %v829, %v852
        %v869 = vadd.f32 %v830, %v853
        %v870 = vadd.f32 %v831, %v854
        %v871 = vadd.f32 %v832, %v855
        %v872 = vadd.f32 %v833, %v856
        %v873 = vadd.f32 %v834, %v857
        %v874 = vadd.f32 %v835, %v858
        %v875 = vadd.f32 %v836, %v859
        %876 = vrot.lane.b32.xlu0 %v246, 112
        %v877 = vpop.permute.xlu0 %876
        %878 = vrot.lane.b32.xlu0 %v248, 112
        %v879 = vpop.permute.xlu0 %878
        %880 = vrot.lane.b32.xlu0 %v250, 112
        %v881 = vpop.permute.xlu0 %880
        %882 = vrot.lane.b32.xlu0 %v252, 112
        %v883 = vpop.permute.xlu0 %882
        %884 = vrot.lane.b32.xlu0 %v254, 112
        %v885 = vpop.permute.xlu0 %884
        %886 = vrot.lane.b32.xlu0 %v256, 112
        %v887 = vpop.permute.xlu0 %886
        %888 = vrot.lane.b32.xlu0 %v258, 112
        %v889 = vpop.permute.xlu0 %888
        %890 = vrot.lane.b32.xlu0 %v260, 112
        %v891 = vpop.permute.xlu0 %890
        %892 = vrot.lane.b32.xlu0 %v247, 112
        %v893 = vpop.permute.xlu0 %892
        %894 = vrot.lane.b32.xlu0 %v249, 112
        %v895 = vpop.permute.xlu0 %894
        %896 = vrot.lane.b32.xlu0 %v251, 112
        %v897 = vpop.permute.xlu0 %896
        %898 = vrot.lane.b32.xlu0 %v253, 112
        %v899 = vpop.permute.xlu0 %898
        %900 = vrot.lane.b32.xlu0 %v255, 112
        %v901 = vpop.permute.xlu0 %900
        %902 = vrot.lane.b32.xlu0 %v257, 112
        %v903 = vpop.permute.xlu0 %902
        %904 = vrot.lane.b32.xlu0 %v259, 112
        %v905 = vpop.permute.xlu0 %904
        %906 = vrot.lane.b32.xlu0 %v261, 112
        %v907 = vpop.permute.xlu0 %906
        %v908 = vsel %vm662, %v877, %v893
        %v909 = vsel %vm662, %v879, %v895
        %v910 = vsel %vm662, %v881, %v897
        %v911 = vsel %vm662, %v883, %v899
        %v912 = vsel %vm662, %v885, %v901
        %v913 = vsel %vm662, %v887, %v903
        %v914 = vsel %vm662, %v889, %v905
        %v915 = vsel %vm662, %v891, %v907
        %v916 = vsel %vm662, %v893, %v877
        %v917 = vsel %vm662, %v895, %v879
        %v918 = vsel %vm662, %v897, %v881
        %v919 = vsel %vm662, %v899, %v883
        %v920 = vsel %vm662, %v901, %v885
        %v921 = vsel %vm662, %v903, %v887
        %v922 = vsel %vm662, %v905, %v889
        %v923 = vsel %vm662, %v907, %v891
        %v924 = vsel %vm386, %v908, 0.0
        %v925 = vsel %vm387, %v916, 0.0
        %v926 = vsel %vm386, %v909, 0.0
        %v927 = vsel %vm387, %v917, 0.0
        %v928 = vsel %vm386, %v910, 0.0
        %v929 = vsel %vm387, %v918, 0.0
        %v930 = vsel %vm386, %v911, 0.0
        %v931 = vsel %vm387, %v919, 0.0
        %v932 = vsel %vm386, %v912, 0.0
        %v933 = vsel %vm387, %v920, 0.0
        %v934 = vsel %vm386, %v913, 0.0
        %v935 = vsel %vm387, %v921, 0.0
        %v936 = vsel %vm386, %v914, 0.0
        %v937 = vsel %vm387, %v922, 0.0
        %v938 = vsel %vm386, %v915, 0.0
        %v939 = vsel %vm387, %v923, 0.0
        %s940 = scalar_lea.vmem [#allocation5], 5
        %v941 = vld [vmem:[%s940] ss:$8 sm:$0x3]
        %v943 = vperm.slane %v941, 0
        %v944 = vperm.slane %v941, 1
        %v947 = vmul.f32 %v924, %v943
        %v948 = vmul.f32 %v925, %v944
        %v949 = vmul.f32 %v926, %v943
        %v950 = vmul.f32 %v927, %v944
        %v951 = vmul.f32 %v928, %v943
        %v952 = vmul.f32 %v929, %v944
        %v953 = vmul.f32 %v930, %v943
        %v954 = vmul.f32 %v931, %v944
        %v955 = vmul.f32 %v932, %v943
        %v956 = vmul.f32 %v933, %v944
        %v957 = vmul.f32 %v934, %v943
        %v958 = vmul.f32 %v935, %v944
        %v959 = vmul.f32 %v936, %v943
        %v960 = vmul.f32 %v937, %v944
        %v961 = vmul.f32 %v938, %v943
        %v962 = vmul.f32 %v939, %v944
        %v963 = vadd.f32 %v860, %v947
        %v964 = vadd.f32 %v861, %v948
        %v965 = vadd.f32 %v862, %v949
        %v966 = vadd.f32 %v863, %v950
        %v967 = vadd.f32 %v864, %v951
        %v968 = vadd.f32 %v865, %v952
        %v969 = vadd.f32 %v866, %v953
        %v970 = vadd.f32 %v867, %v954
        %v971 = vadd.f32 %v868, %v955
        %v972 = vadd.f32 %v869, %v956
        %v973 = vadd.f32 %v870, %v957
        %v974 = vadd.f32 %v871, %v958
        %v975 = vadd.f32 %v872, %v959
        %v976 = vadd.f32 %v873, %v960
        %v977 = vadd.f32 %v874, %v961
        %v978 = vadd.f32 %v875, %v962
        %979 = vrot.lane.b32.xlu0 %v472, 16
        %v980 = vpop.permute.xlu0 %979
        %981 = vrot.lane.b32.xlu0 %v474, 16
        %v982 = vpop.permute.xlu0 %981
        %983 = vrot.lane.b32.xlu0 %v476, 16
        %v984 = vpop.permute.xlu0 %983
        %985 = vrot.lane.b32.xlu0 %v478, 16
        %v986 = vpop.permute.xlu0 %985
        %987 = vrot.lane.b32.xlu0 %v480, 16
        %v988 = vpop.permute.xlu0 %987
        %989 = vrot.lane.b32.xlu0 %v482, 16
        %v990 = vpop.permute.xlu0 %989
        %991 = vrot.lane.b32.xlu0 %v484, 16
        %v992 = vpop.permute.xlu0 %991
        %993 = vrot.lane.b32.xlu0 %v486, 16
        %v994 = vpop.permute.xlu0 %993
        %995 = vrot.lane.b32.xlu0 %v473, 16
        %v996 = vpop.permute.xlu0 %995
        %997 = vrot.lane.b32.xlu0 %v475, 16
        %v998 = vpop.permute.xlu0 %997
        %999 = vrot.lane.b32.xlu0 %v477, 16
        %v1000 = vpop.permute.xlu0 %999
        %1001 = vrot.lane.b32.xlu0 %v479, 16
        %v1002 = vpop.permute.xlu0 %1001
        %1003 = vrot.lane.b32.xlu0 %v481, 16
        %v1004 = vpop.permute.xlu0 %1003
        %1005 = vrot.lane.b32.xlu0 %v483, 16
        %v1006 = vpop.permute.xlu0 %1005
        %1007 = vrot.lane.b32.xlu0 %v485, 16
        %v1008 = vpop.permute.xlu0 %1007
        %1009 = vrot.lane.b32.xlu0 %v487, 16
        %v1010 = vpop.permute.xlu0 %1009
        %v1011 = vsel %vm520, %v980, %v996
        %v1012 = vsel %vm520, %v982, %v998
        %v1013 = vsel %vm520, %v984, %v1000
        %v1014 = vsel %vm520, %v986, %v1002
        %v1015 = vsel %vm520, %v988, %v1004
        %v1016 = vsel %vm520, %v990, %v1006
        %v1017 = vsel %vm520, %v992, %v1008
        %v1018 = vsel %vm520, %v994, %v1010
        %v1019 = vsel %vm520, %v996, %v980
        %v1020 = vsel %vm520, %v998, %v982
        %v1021 = vsel %vm520, %v1000, %v984
        %v1022 = vsel %vm520, %v1002, %v986
        %v1023 = vsel %vm520, %v1004, %v988
        %v1024 = vsel %vm520, %v1006, %v990
        %v1025 = vsel %vm520, %v1008, %v992
        %v1026 = vsel %vm520, %v1010, %v994
        %v1027 = vsel %vm388, %v1019, 0.0
        %v1028 = vsel %vm389, %v1011, 0.0
        %v1029 = vsel %vm388, %v1020, 0.0
        %v1030 = vsel %vm389, %v1012, 0.0
        %v1031 = vsel %vm388, %v1021, 0.0
        %v1032 = vsel %vm389, %v1013, 0.0
        %v1033 = vsel %vm388, %v1022, 0.0
        %v1034 = vsel %vm389, %v1014, 0.0
        %v1035 = vsel %vm388, %v1023, 0.0
        %v1036 = vsel %vm389, %v1015, 0.0
        %v1037 = vsel %vm388, %v1024, 0.0
        %v1038 = vsel %vm389, %v1016, 0.0
        %v1039 = vsel %vm388, %v1025, 0.0
        %v1040 = vsel %vm389, %v1017, 0.0
        %v1041 = vsel %vm388, %v1026, 0.0
        %v1042 = vsel %vm389, %v1018, 0.0
        %s1043 = scalar_lea.vmem [#allocation5], 6
        %v1044 = vld [vmem:[%s1043] ss:$8 sm:$0x3]
        %v1046 = vperm.slane %v1044, 0
        %v1047 = vperm.slane %v1044, 1
        %v1050 = vmul.f32 %v1027, %v1046
        %v1051 = vmul.f32 %v1028, %v1047
        %v1052 = vmul.f32 %v1029, %v1046
        %v1053 = vmul.f32 %v1030, %v1047
        %v1054 = vmul.f32 %v1031, %v1046
        %v1055 = vmul.f32 %v1032, %v1047
        %v1056 = vmul.f32 %v1033, %v1046
        %v1057 = vmul.f32 %v1034, %v1047
        %v1058 = vmul.f32 %v1035, %v1046
        %v1059 = vmul.f32 %v1036, %v1047
        %v1060 = vmul.f32 %v1037, %v1046
        %v1061 = vmul.f32 %v1038, %v1047
        %v1062 = vmul.f32 %v1039, %v1046
        %v1063 = vmul.f32 %v1040, %v1047
        %v1064 = vmul.f32 %v1041, %v1046
        %v1065 = vmul.f32 %v1042, %v1047
        %v1066 = vadd.f32 %v963, %v1050
        %v1067 = vadd.f32 %v964, %v1051
        %v1068 = vadd.f32 %v965, %v1052
        %v1069 = vadd.f32 %v966, %v1053
        %v1070 = vadd.f32 %v967, %v1054
        %v1071 = vadd.f32 %v968, %v1055
        %v1072 = vadd.f32 %v969, %v1056
        %v1073 = vadd.f32 %v970, %v1057
        %v1074 = vadd.f32 %v971, %v1058
        %v1075 = vadd.f32 %v972, %v1059
        %v1076 = vadd.f32 %v973, %v1060
        %v1077 = vadd.f32 %v974, %v1061
        %v1078 = vadd.f32 %v975, %v1062
        %v1079 = vadd.f32 %v976, %v1063
        %v1080 = vadd.f32 %v977, %v1064
        %v1081 = vadd.f32 %v978, %v1065
        %s1082 = scalar_lea.vmem [#allocation5], 7
        %v1083 = vld [vmem:[%s1082] ss:$8 sm:$0x3]
        %v1085 = vperm.slane %v1083, 0
        %v1086 = vperm.slane %v1083, 1
        %v1089 = vmul.f32 %v472, %v1085
        %v1090 = vmul.f32 %v473, %v1086
        %v1091 = vmul.f32 %v474, %v1085
        %v1092 = vmul.f32 %v475, %v1086
        %v1093 = vmul.f32 %v476, %v1085
        %v1094 = vmul.f32 %v477, %v1086
        %v1095 = vmul.f32 %v478, %v1085
        %v1096 = vmul.f32 %v479, %v1086
        %v1097 = vmul.f32 %v480, %v1085
        %v1098 = vmul.f32 %v481, %v1086
        %v1099 = vmul.f32 %v482, %v1085
        %v1100 = vmul.f32 %v483, %v1086
        %v1101 = vmul.f32 %v484, %v1085
        %v1102 = vmul.f32 %v485, %v1086
        %v1103 = vmul.f32 %v486, %v1085
        %v1104 = vmul.f32 %v487, %v1086
        %v1105 = vadd.f32 %v1066, %v1089
        %v1106 = vadd.f32 %v1067, %v1090
        %v1107 = vadd.f32 %v1068, %v1091
        %v1108 = vadd.f32 %v1069, %v1092
        %v1109 = vadd.f32 %v1070, %v1093
        %v1110 = vadd.f32 %v1071, %v1094
        %v1111 = vadd.f32 %v1072, %v1095
        %v1112 = vadd.f32 %v1073, %v1096
        %v1113 = vadd.f32 %v1074, %v1097
        %v1114 = vadd.f32 %v1075, %v1098
        %v1115 = vadd.f32 %v1076, %v1099
        %v1116 = vadd.f32 %v1077, %v1100
        %v1117 = vadd.f32 %v1078, %v1101
        %v1118 = vadd.f32 %v1079, %v1102
        %v1119 = vadd.f32 %v1080, %v1103
        %v1120 = vadd.f32 %v1081, %v1104
        %1121 = vrot.lane.b32.xlu0 %v472, 112
        %v1122 = vpop.permute.xlu0 %1121
        %1123 = vrot.lane.b32.xlu0 %v474, 112
        %v1124 = vpop.permute.xlu0 %1123
        %1125 = vrot.lane.b32.xlu0 %v476, 112
        %v1126 = vpop.permute.xlu0 %1125
        %1127 = vrot.lane.b32.xlu0 %v478, 112
        %v1128 = vpop.permute.xlu0 %1127
        %1129 = vrot.lane.b32.xlu0 %v480, 112
        %v1130 = vpop.permute.xlu0 %1129
        %1131 = vrot.lane.b32.xlu0 %v482, 112
        %v1132 = vpop.permute.xlu0 %1131
        %1133 = vrot.lane.b32.xlu0 %v484, 112
        %v1134 = vpop.permute.xlu0 %1133
        %1135 = vrot.lane.b32.xlu0 %v486, 112
        %v1136 = vpop.permute.xlu0 %1135
        %1137 = vrot.lane.b32.xlu0 %v473, 112
        %v1138 = vpop.permute.xlu0 %1137
        %1139 = vrot.lane.b32.xlu0 %v475, 112
        %v1140 = vpop.permute.xlu0 %1139
        %1141 = vrot.lane.b32.xlu0 %v477, 112
        %v1142 = vpop.permute.xlu0 %1141
        %1143 = vrot.lane.b32.xlu0 %v479, 112
        %v1144 = vpop.permute.xlu0 %1143
        %1145 = vrot.lane.b32.xlu0 %v481, 112
        %v1146 = vpop.permute.xlu0 %1145
        %1147 = vrot.lane.b32.xlu0 %v483, 112
        %v1148 = vpop.permute.xlu0 %1147
        %1149 = vrot.lane.b32.xlu0 %v485, 112
        %v1150 = vpop.permute.xlu0 %1149
        %1151 = vrot.lane.b32.xlu0 %v487, 112
        %v1152 = vpop.permute.xlu0 %1151
        %v1153 = vsel %vm662, %v1122, %v1138
        %v1154 = vsel %vm662, %v1124, %v1140
        %v1155 = vsel %vm662, %v1126, %v1142
        %v1156 = vsel %vm662, %v1128, %v1144
        %v1157 = vsel %vm662, %v1130, %v1146
        %v1158 = vsel %vm662, %v1132, %v1148
        %v1159 = vsel %vm662, %v1134, %v1150
        %v1160 = vsel %vm662, %v1136, %v1152
        %v1161 = vsel %vm662, %v1138, %v1122
        %v1162 = vsel %vm662, %v1140, %v1124
        %v1163 = vsel %vm662, %v1142, %v1126
        %v1164 = vsel %vm662, %v1144, %v1128
        %v1165 = vsel %vm662, %v1146, %v1130
        %v1166 = vsel %vm662, %v1148, %v1132
        %v1167 = vsel %vm662, %v1150, %v1134
        %v1168 = vsel %vm662, %v1152, %v1136
        %v1169 = vsel %vm386, %v1153, 0.0
        %v1170 = vsel %vm387, %v1161, 0.0
        %v1171 = vsel %vm386, %v1154, 0.0
        %v1172 = vsel %vm387, %v1162, 0.0
        %v1173 = vsel %vm386, %v1155, 0.0
        %v1174 = vsel %vm387, %v1163, 0.0
        %v1175 = vsel %vm386, %v1156, 0.0
        %v1176 = vsel %vm387, %v1164, 0.0
        %v1177 = vsel %vm386, %v1157, 0.0
        %v1178 = vsel %vm387, %v1165, 0.0
        %v1179 = vsel %vm386, %v1158, 0.0
        %v1180 = vsel %vm387, %v1166, 0.0
        %v1181 = vsel %vm386, %v1159, 0.0
        %v1182 = vsel %vm387, %v1167, 0.0
        %v1183 = vsel %vm386, %v1160, 0.0
        %v1184 = vsel %vm387, %v1168, 0.0
        %s1185 = scalar_lea.vmem [#allocation5], 16
        %v1186 = vld [vmem:[%s1185] ss:$8 sm:$0x3]
        %v1188 = vperm.slane %v1186, 0
        %v1189 = vperm.slane %v1186, 1
        %v1192 = vmul.f32 %v1169, %v1188
        %v1193 = vmul.f32 %v1170, %v1189
        %v1194 = vmul.f32 %v1171, %v1188
        %v1195 = vmul.f32 %v1172, %v1189
        %v1196 = vmul.f32 %v1173, %v1188
        %v1197 = vmul.f32 %v1174, %v1189
        %v1198 = vmul.f32 %v1175, %v1188
        %v1199 = vmul.f32 %v1176, %v1189
        %v1200 = vmul.f32 %v1177, %v1188
        %v1201 = vmul.f32 %v1178, %v1189
        %v1202 = vmul.f32 %v1179, %v1188
        %v1203 = vmul.f32 %v1180, %v1189
        %v1204 = vmul.f32 %v1181, %v1188
        %v1205 = vmul.f32 %v1182, %v1189
        %v1206 = vmul.f32 %v1183, %v1188
        %v1207 = vmul.f32 %v1184, %v1189
        %v1208 = vadd.f32 %v1105, %v1192
        %v1209 = vadd.f32 %v1106, %v1193
        %v1210 = vadd.f32 %v1107, %v1194
        %v1211 = vadd.f32 %v1108, %v1195
        %v1212 = vadd.f32 %v1109, %v1196
        %v1213 = vadd.f32 %v1110, %v1197
        %v1214 = vadd.f32 %v1111, %v1198
        %v1215 = vadd.f32 %v1112, %v1199
        %v1216 = vadd.f32 %v1113, %v1200
        %v1217 = vadd.f32 %v1114, %v1201
        %v1218 = vadd.f32 %v1115, %v1202
        %v1219 = vadd.f32 %v1116, %v1203
        %v1220 = vadd.f32 %v1117, %v1204
        %v1221 = vadd.f32 %v1118, %v1205
        %v1222 = vadd.f32 %v1119, %v1206
        %v1223 = vadd.f32 %v1120, %v1207
        %s1224 = scalar_lea.vmem [#allocation5], 17
        %v1225 = vld [vmem:[%s1224] ss:$8 sm:$0x3]
        %v1227 = vperm.slane %v1225, 0
        %v1228 = vperm.slane %v1225, 1
        %v1231 = vadd.f32 %v1208, %v1227
        %v1232 = vadd.f32 %v1209, %v1228
        %v1233 = vadd.f32 %v1210, %v1227
        %v1234 = vadd.f32 %v1211, %v1228
        %v1235 = vadd.f32 %v1212, %v1227
        %v1236 = vadd.f32 %v1213, %v1228
        %v1237 = vadd.f32 %v1214, %v1227
        %v1238 = vadd.f32 %v1215, %v1228
        %v1239 = vadd.f32 %v1216, %v1227
        %v1240 = vadd.f32 %v1217, %v1228
        %v1241 = vadd.f32 %v1218, %v1227
        %v1242 = vadd.f32 %v1219, %v1228
        %v1243 = vadd.f32 %v1220, %v1227
        %v1244 = vadd.f32 %v1221, %v1228
        %v1245 = vadd.f32 %v1222, %v1227
        %v1246 = vadd.f32 %v1223, %v1228
        %v1247 = vxor.u32 %v1231, 2147483648
        %v1248 = vxor.u32 %v1232, 2147483648
        %v1249 = vxor.u32 %v1233, 2147483648
        %v1250 = vxor.u32 %v1234, 2147483648
        %v1251 = vxor.u32 %v1235, 2147483648
        %v1252 = vxor.u32 %v1236, 2147483648
        %v1253 = vxor.u32 %v1237, 2147483648
        %v1254 = vxor.u32 %v1238, 2147483648
        %v1255 = vxor.u32 %v1239, 2147483648
        %v1256 = vxor.u32 %v1240, 2147483648
        %v1257 = vxor.u32 %v1241, 2147483648
        %v1258 = vxor.u32 %v1242, 2147483648
        %v1259 = vxor.u32 %v1243, 2147483648
        %v1260 = vxor.u32 %v1244, 2147483648
        %v1261 = vxor.u32 %v1245, 2147483648
        %v1262 = vxor.u32 %v1246, 2147483648
        %v1263 = vmul.f32 %v1247, 1.442695
        %v1264 = vpow.pop %v1263
        %v1265 = vmul.f32 %v1248, 1.442695
        %v1266 = vpow.pop %v1265
        %v1267 = vmul.f32 %v1249, 1.442695
        %v1268 = vpow.pop %v1267
        %v1269 = vmul.f32 %v1250, 1.442695
        %v1270 = vpow.pop %v1269
        %v1271 = vmul.f32 %v1251, 1.442695
        %v1272 = vpow.pop %v1271
        %v1273 = vmul.f32 %v1252, 1.442695
        %v1274 = vpow.pop %v1273
        %v1275 = vmul.f32 %v1253, 1.442695
        %v1276 = vpow.pop %v1275
        %v1277 = vmul.f32 %v1254, 1.442695
        %v1278 = vpow.pop %v1277
        %v1279 = vmul.f32 %v1255, 1.442695
        %v1280 = vpow.pop %v1279
        %v1281 = vmul.f32 %v1256, 1.442695
        %v1282 = vpow.pop %v1281
        %v1283 = vmul.f32 %v1257, 1.442695
        %v1284 = vpow.pop %v1283
        %v1285 = vmul.f32 %v1258, 1.442695
        %v1286 = vpow.pop %v1285
        %v1287 = vmul.f32 %v1259, 1.442695
        %v1288 = vpow.pop %v1287
        %v1289 = vmul.f32 %v1260, 1.442695
        %v1290 = vpow.pop %v1289
        %v1291 = vmul.f32 %v1261, 1.442695
        %v1292 = vpow.pop %v1291
        %v1293 = vmul.f32 %v1262, 1.442695
        %v1294 = vpow.pop %v1293
        %v1295 = vadd.f32 %v1264, 1.0
        %v1296 = vadd.f32 %v1266, 1.0
        %v1297 = vadd.f32 %v1268, 1.0
        %v1298 = vadd.f32 %v1270, 1.0
        %v1299 = vadd.f32 %v1272, 1.0
        %v1300 = vadd.f32 %v1274, 1.0
        %v1301 = vadd.f32 %v1276, 1.0
        %v1302 = vadd.f32 %v1278, 1.0
        %v1303 = vadd.f32 %v1280, 1.0
        %v1304 = vadd.f32 %v1282, 1.0
        %v1305 = vadd.f32 %v1284, 1.0
        %v1306 = vadd.f32 %v1286, 1.0
        %v1307 = vadd.f32 %v1288, 1.0
        %v1308 = vadd.f32 %v1290, 1.0
        %v1309 = vadd.f32 %v1292, 1.0
        %v1310 = vadd.f32 %v1294, 1.0
        %v1311 = vrcp.pop %v1295
        %v1312 = vmul.f32 %v1295, %v1311
        %v1313 = vsub.f32 1.0, %v1312
        %v1314 = vmul.f32 %v1311, %v1313
        %v1315 = vadd.f32 %v1311, %v1314
        %vm1316 = vweird.f32 %v1295
        %vm1317 = vweird.f32 %v1311
        %vm1318 = vmor %vm1316, %vm1317
        %v1319 = vsel %vm1318, %v1311, %v1315
        %v1320 = vand.u32 2147483647, %v1295
        %vm1321 = vcmp.eq.f32.partialorder %v1320, 8.507059e+37
        %v1322 = vand.u32 %v1295, 2147483648
        %v1323 = vor.u32 1.1754944e-38, %v1322
        %v1324 = vsel %vm1321, %v1323, %v1319
        %v1325 = vmul.f32 1.0, %v1324
        %v1326 = vrcp.pop %v1296
        %v1327 = vmul.f32 %v1296, %v1326
        %v1328 = vsub.f32 1.0, %v1327
        %v1329 = vmul.f32 %v1326, %v1328
        %v1330 = vadd.f32 %v1326, %v1329
        %vm1331 = vweird.f32 %v1296
        %vm1332 = vweird.f32 %v1326
        %vm1333 = vmor %vm1331, %vm1332
        %v1334 = vsel %vm1333, %v1326, %v1330
        %v1335 = vand.u32 2147483647, %v1296
        %vm1336 = vcmp.eq.f32.partialorder %v1335, 8.507059e+37
        %v1337 = vand.u32 %v1296, 2147483648
        %v1338 = vor.u32 1.1754944e-38, %v1337
        %v1339 = vsel %vm1336, %v1338, %v1334
        %v1340 = vmul.f32 1.0, %v1339
        %v1341 = vrcp.pop %v1297
        %v1342 = vmul.f32 %v1297, %v1341
        %v1343 = vsub.f32 1.0, %v1342
        %v1344 = vmul.f32 %v1341, %v1343
        %v1345 = vadd.f32 %v1341, %v1344
        %vm1346 = vweird.f32 %v1297
        %vm1347 = vweird.f32 %v1341
        %vm1348 = vmor %vm1346, %vm1347
        %v1349 = vsel %vm1348, %v1341, %v1345
        %v1350 = vand.u32 2147483647, %v1297
        %vm1351 = vcmp.eq.f32.partialorder %v1350, 8.507059e+37
        %v1352 = vand.u32 %v1297, 2147483648
        %v1353 = vor.u32 1.1754944e-38, %v1352
        %v1354 = vsel %vm1351, %v1353, %v1349
        %v1355 = vmul.f32 1.0, %v1354
        %v1356 = vrcp.pop %v1298
        %v1357 = vmul.f32 %v1298, %v1356
        %v1358 = vsub.f32 1.0, %v1357
        %v1359 = vmul.f32 %v1356, %v1358
        %v1360 = vadd.f32 %v1356, %v1359
        %vm1361 = vweird.f32 %v1298
        %vm1362 = vweird.f32 %v1356
        %vm1363 = vmor %vm1361, %vm1362
        %v1364 = vsel %vm1363, %v1356, %v1360
        %v1365 = vand.u32 2147483647, %v1298
        %vm1366 = vcmp.eq.f32.partialorder %v1365, 8.507059e+37
        %v1367 = vand.u32 %v1298, 2147483648
        %v1368 = vor.u32 1.1754944e-38, %v1367
        %v1369 = vsel %vm1366, %v1368, %v1364
        %v1370 = vmul.f32 1.0, %v1369
        %v1371 = vrcp.pop %v1299
        %v1372 = vmul.f32 %v1299, %v1371
        %v1373 = vsub.f32 1.0, %v1372
        %v1374 = vmul.f32 %v1371, %v1373
        %v1375 = vadd.f32 %v1371, %v1374
        %vm1376 = vweird.f32 %v1299
        %vm1377 = vweird.f32 %v1371
        %vm1378 = vmor %vm1376, %vm1377
        %v1379 = vsel %vm1378, %v1371, %v1375
        %v1380 = vand.u32 2147483647, %v1299
        %vm1381 = vcmp.eq.f32.partialorder %v1380, 8.507059e+37
        %v1382 = vand.u32 %v1299, 2147483648
        %v1383 = vor.u32 1.1754944e-38, %v1382
        %v1384 = vsel %vm1381, %v1383, %v1379
        %v1385 = vmul.f32 1.0, %v1384
        %v1386 = vrcp.pop %v1300
        %v1387 = vmul.f32 %v1300, %v1386
        %v1388 = vsub.f32 1.0, %v1387
        %v1389 = vmul.f32 %v1386, %v1388
        %v1390 = vadd.f32 %v1386, %v1389
        %vm1391 = vweird.f32 %v1300
        %vm1392 = vweird.f32 %v1386
        %vm1393 = vmor %vm1391, %vm1392
        %v1394 = vsel %vm1393, %v1386, %v1390
        %v1395 = vand.u32 2147483647, %v1300
        %vm1396 = vcmp.eq.f32.partialorder %v1395, 8.507059e+37
        %v1397 = vand.u32 %v1300, 2147483648
        %v1398 = vor.u32 1.1754944e-38, %v1397
        %v1399 = vsel %vm1396, %v1398, %v1394
        %v1400 = vmul.f32 1.0, %v1399
        %v1401 = vrcp.pop %v1301
        %v1402 = vmul.f32 %v1301, %v1401
        %v1403 = vsub.f32 1.0, %v1402
        %v1404 = vmul.f32 %v1401, %v1403
        %v1405 = vadd.f32 %v1401, %v1404
        %vm1406 = vweird.f32 %v1301
        %vm1407 = vweird.f32 %v1401
        %vm1408 = vmor %vm1406, %vm1407
        %v1409 = vsel %vm1408, %v1401, %v1405
        %v1410 = vand.u32 2147483647, %v1301
        %vm1411 = vcmp.eq.f32.partialorder %v1410, 8.507059e+37
        %v1412 = vand.u32 %v1301, 2147483648
        %v1413 = vor.u32 1.1754944e-38, %v1412
        %v1414 = vsel %vm1411, %v1413, %v1409
        %v1415 = vmul.f32 1.0, %v1414
        %v1416 = vrcp.pop %v1302
        %v1417 = vmul.f32 %v1302, %v1416
        %v1418 = vsub.f32 1.0, %v1417
        %v1419 = vmul.f32 %v1416, %v1418
        %v1420 = vadd.f32 %v1416, %v1419
        %vm1421 = vweird.f32 %v1302
        %vm1422 = vweird.f32 %v1416
        %vm1423 = vmor %vm1421, %vm1422
        %v1424 = vsel %vm1423, %v1416, %v1420
        %v1425 = vand.u32 2147483647, %v1302
        %vm1426 = vcmp.eq.f32.partialorder %v1425, 8.507059e+37
        %v1427 = vand.u32 %v1302, 2147483648
        %v1428 = vor.u32 1.1754944e-38, %v1427
        %v1429 = vsel %vm1426, %v1428, %v1424
        %v1430 = vmul.f32 1.0, %v1429
        %v1431 = vrcp.pop %v1303
        %v1432 = vmul.f32 %v1303, %v1431
        %v1433 = vsub.f32 1.0, %v1432
        %v1434 = vmul.f32 %v1431, %v1433
        %v1435 = vadd.f32 %v1431, %v1434
        %vm1436 = vweird.f32 %v1303
        %vm1437 = vweird.f32 %v1431
        %vm1438 = vmor %vm1436, %vm1437
        %v1439 = vsel %vm1438, %v1431, %v1435
        %v1440 = vand.u32 2147483647, %v1303
        %vm1441 = vcmp.eq.f32.partialorder %v1440, 8.507059e+37
        %v1442 = vand.u32 %v1303, 2147483648
        %v1443 = vor.u32 1.1754944e-38, %v1442
        %v1444 = vsel %vm1441, %v1443, %v1439
        %v1445 = vmul.f32 1.0, %v1444
        %v1446 = vrcp.pop %v1304
        %v1447 = vmul.f32 %v1304, %v1446
        %v1448 = vsub.f32 1.0, %v1447
        %v1449 = vmul.f32 %v1446, %v1448
        %v1450 = vadd.f32 %v1446, %v1449
        %vm1451 = vweird.f32 %v1304
        %vm1452 = vweird.f32 %v1446
        %vm1453 = vmor %vm1451, %vm1452
        %v1454 = vsel %vm1453, %v1446, %v1450
        %v1455 = vand.u32 2147483647, %v1304
        %vm1456 = vcmp.eq.f32.partialorder %v1455, 8.507059e+37
        %v1457 = vand.u32 %v1304, 2147483648
        %v1458 = vor.u32 1.1754944e-38, %v1457
        %v1459 = vsel %vm1456, %v1458, %v1454
        %v1460 = vmul.f32 1.0, %v1459
        %v1461 = vrcp.pop %v1305
        %v1462 = vmul.f32 %v1305, %v1461
        %v1463 = vsub.f32 1.0, %v1462
        %v1464 = vmul.f32 %v1461, %v1463
        %v1465 = vadd.f32 %v1461, %v1464
        %vm1466 = vweird.f32 %v1305
        %vm1467 = vweird.f32 %v1461
        %vm1468 = vmor %vm1466, %vm1467
        %v1469 = vsel %vm1468, %v1461, %v1465
        %v1470 = vand.u32 2147483647, %v1305
        %vm1471 = vcmp.eq.f32.partialorder %v1470, 8.507059e+37
        %v1472 = vand.u32 %v1305, 2147483648
        %v1473 = vor.u32 1.1754944e-38, %v1472
        %v1474 = vsel %vm1471, %v1473, %v1469
        %v1475 = vmul.f32 1.0, %v1474
        %v1476 = vrcp.pop %v1306
        %v1477 = vmul.f32 %v1306, %v1476
        %v1478 = vsub.f32 1.0, %v1477
        %v1479 = vmul.f32 %v1476, %v1478
        %v1480 = vadd.f32 %v1476, %v1479
        %vm1481 = vweird.f32 %v1306
        %vm1482 = vweird.f32 %v1476
        %vm1483 = vmor %vm1481, %vm1482
        %v1484 = vsel %vm1483, %v1476, %v1480
        %v1485 = vand.u32 2147483647, %v1306
        %vm1486 = vcmp.eq.f32.partialorder %v1485, 8.507059e+37
        %v1487 = vand.u32 %v1306, 2147483648
        %v1488 = vor.u32 1.1754944e-38, %v1487
        %v1489 = vsel %vm1486, %v1488, %v1484
        %v1490 = vmul.f32 1.0, %v1489
        %v1491 = vrcp.pop %v1307
        %v1492 = vmul.f32 %v1307, %v1491
        %v1493 = vsub.f32 1.0, %v1492
        %v1494 = vmul.f32 %v1491, %v1493
        %v1495 = vadd.f32 %v1491, %v1494
        %vm1496 = vweird.f32 %v1307
        %vm1497 = vweird.f32 %v1491
        %vm1498 = vmor %vm1496, %vm1497
        %v1499 = vsel %vm1498, %v1491, %v1495
        %v1500 = vand.u32 2147483647, %v1307
        %vm1501 = vcmp.eq.f32.partialorder %v1500, 8.507059e+37
        %v1502 = vand.u32 %v1307, 2147483648
        %v1503 = vor.u32 1.1754944e-38, %v1502
        %v1504 = vsel %vm1501, %v1503, %v1499
        %v1505 = vmul.f32 1.0, %v1504
        %v1506 = vrcp.pop %v1308
        %v1507 = vmul.f32 %v1308, %v1506
        %v1508 = vsub.f32 1.0, %v1507
        %v1509 = vmul.f32 %v1506, %v1508
        %v1510 = vadd.f32 %v1506, %v1509
        %vm1511 = vweird.f32 %v1308
        %vm1512 = vweird.f32 %v1506
        %vm1513 = vmor %vm1511, %vm1512
        %v1514 = vsel %vm1513, %v1506, %v1510
        %v1515 = vand.u32 2147483647, %v1308
        %vm1516 = vcmp.eq.f32.partialorder %v1515, 8.507059e+37
        %v1517 = vand.u32 %v1308, 2147483648
        %v1518 = vor.u32 1.1754944e-38, %v1517
        %v1519 = vsel %vm1516, %v1518, %v1514
        %v1520 = vmul.f32 1.0, %v1519
        %v1521 = vrcp.pop %v1309
        %v1522 = vmul.f32 %v1309, %v1521
        %v1523 = vsub.f32 1.0, %v1522
        %v1524 = vmul.f32 %v1521, %v1523
        %v1525 = vadd.f32 %v1521, %v1524
        %vm1526 = vweird.f32 %v1309
        %vm1527 = vweird.f32 %v1521
        %vm1528 = vmor %vm1526, %vm1527
        %v1529 = vsel %vm1528, %v1521, %v1525
        %v1530 = vand.u32 2147483647, %v1309
        %vm1531 = vcmp.eq.f32.partialorder %v1530, 8.507059e+37
        %v1532 = vand.u32 %v1309, 2147483648
        %v1533 = vor.u32 1.1754944e-38, %v1532
        %v1534 = vsel %vm1531, %v1533, %v1529
        %v1535 = vmul.f32 1.0, %v1534
        %v1536 = vrcp.pop %v1310
        %v1537 = vmul.f32 %v1310, %v1536
        %v1538 = vsub.f32 1.0, %v1537
        %v1539 = vmul.f32 %v1536, %v1538
        %v1540 = vadd.f32 %v1536, %v1539
        %vm1541 = vweird.f32 %v1310
        %vm1542 = vweird.f32 %v1536
        %vm1543 = vmor %vm1541, %vm1542
        %v1544 = vsel %vm1543, %v1536, %v1540
        %v1545 = vand.u32 2147483647, %v1310
        %vm1546 = vcmp.eq.f32.partialorder %v1545, 8.507059e+37
        %v1547 = vand.u32 %v1310, 2147483648
        %v1548 = vor.u32 1.1754944e-38, %v1547
        %v1549 = vsel %vm1546, %v1548, %v1544
        %v1550 = vmul.f32 1.0, %v1549
        %v1551 = vmul.f32 %v1231, %v1325
        %v1552 = vmul.f32 %v1232, %v1340
        %v1553 = vmul.f32 %v1233, %v1355
        %v1554 = vmul.f32 %v1234, %v1370
        %v1555 = vmul.f32 %v1235, %v1385
        %v1556 = vmul.f32 %v1236, %v1400
        %v1557 = vmul.f32 %v1237, %v1415
        %v1558 = vmul.f32 %v1238, %v1430
        %v1559 = vmul.f32 %v1239, %v1445
        %v1560 = vmul.f32 %v1240, %v1460
        %v1561 = vmul.f32 %v1241, %v1475
        %v1562 = vmul.f32 %v1242, %v1490
        %v1563 = vmul.f32 %v1243, %v1505
        %v1564 = vmul.f32 %v1244, %v1520
        %v1565 = vmul.f32 %v1245, %v1535
        %v1566 = vmul.f32 %v1246, %v1550
        %v1567 = vpack.c.bf16 %v1553, %v1551
        %v1568 = vpack.c.bf16 %v1554, %v1552
        %v1569 = vpack.c.bf16 %v1557, %v1555
        %v1570 = vpack.c.bf16 %v1558, %v1556
        %v1571 = vpack.c.bf16 %v1561, %v1559
        %v1572 = vpack.c.bf16 %v1562, %v1560
        %v1573 = vpack.c.bf16 %v1565, %v1563
        %v1574 = vpack.c.bf16 %v1566, %v1564
        %v1575 = vld [vmem:[%s2] sm:$0xff]
        %v1576 = vld [vmem:[%s2 + $0x8] sm:$0xff]
        %v1577 = vld [vmem:[%s2 + $0x10] sm:$0xff]
        %v1578 = vld [vmem:[%s2 + $0x18] sm:$0xff]
        %v1579 = vld [vmem:[%s2 + $0x20] sm:$0xff]
        %v1580 = vld [vmem:[%s2 + $0x28] sm:$0xff]
        %v1581 = vld [vmem:[%s2 + $0x30] sm:$0xff]
        %v1582 = vld [vmem:[%s2 + $0x38] sm:$0xff]
        %v1583 = vld [vmem:[%s2 + $0x40] sm:$0xff]
        %v1584 = vld [vmem:[%s2 + $0x48] sm:$0xff]
        %v1585 = vld [vmem:[%s2 + $0x50] sm:$0xff]
        %v1586 = vld [vmem:[%s2 + $0x58] sm:$0xff]
        %v1587 = vld [vmem:[%s2 + $0x60] sm:$0xff]
        %v1588 = vld [vmem:[%s2 + $0x68] sm:$0xff]
        %v1589 = vld [vmem:[%s2 + $0x70] sm:$0xff]
        %v1590 = vld [vmem:[%s2 + $0x78] sm:$0xff]
        %v1591 = vld [vmem:[%s2 + $0x80] sm:$0xff]
        %v1592 = vld [vmem:[%s2 + $0x88] sm:$0xff]
        %v1593 = vld [vmem:[%s2 + $0x90] sm:$0xff]
        %v1594 = vld [vmem:[%s2 + $0x98] sm:$0xff]
        %v1595 = vld [vmem:[%s2 + $0xa0] sm:$0xff]
        %v1596 = vld [vmem:[%s2 + $0xa8] sm:$0xff]
        %v1597 = vld [vmem:[%s2 + $0xb0] sm:$0xff]
        %v1598 = vld [vmem:[%s2 + $0xb8] sm:$0xff]
        %v1599 = vld [vmem:[%s2 + $0xc0] sm:$0xff]
        %v1600 = vld [vmem:[%s2 + $0xc8] sm:$0xff]
        %v1601 = vld [vmem:[%s2 + $0xd0] sm:$0xff]
        %v1602 = vld [vmem:[%s2 + $0xd8] sm:$0xff]
        %v1603 = vld [vmem:[%s2 + $0xe0] sm:$0xff]
        %v1604 = vld [vmem:[%s2 + $0xe8] sm:$0xff]
        %v1605 = vld [vmem:[%s2 + $0xf0] sm:$0xff]
        %v1606 = vld [vmem:[%s2 + $0xf8] sm:$0xff]
        %s1607 = scalar_lea.vmem [#allocation5], 18
        %v1608 = vld [vmem:[%s1607] ss:$8 sm:$0x3]
        %v1610 = vperm.slane %v1608, 0
        %v1611 = vperm.slane %v1608, 1
        %v1646 = vunpack.c.l.b16 %v1575
        %v1647 = vunpack.c.h.b16 %v1575
        %v1648 = vunpack.c.l.b16 %v1576
        %v1649 = vunpack.c.h.b16 %v1576
        %v1650 = vunpack.c.l.b16 %v1577
        %v1651 = vunpack.c.h.b16 %v1577
        %v1652 = vunpack.c.l.b16 %v1578
        %v1653 = vunpack.c.h.b16 %v1578
        %v1654 = vunpack.c.l.b16 %v1579
        %v1655 = vunpack.c.h.b16 %v1579
        %v1656 = vunpack.c.l.b16 %v1580
        %v1657 = vunpack.c.h.b16 %v1580
        %v1658 = vunpack.c.l.b16 %v1581
        %v1659 = vunpack.c.h.b16 %v1581
        %v1660 = vunpack.c.l.b16 %v1582
        %v1661 = vunpack.c.h.b16 %v1582
        %v1662 = vunpack.c.l.b16 %v1583
        %v1663 = vunpack.c.h.b16 %v1583
        %v1664 = vunpack.c.l.b16 %v1584
        %v1665 = vunpack.c.h.b16 %v1584
        %v1666 = vunpack.c.l.b16 %v1585
        %v1667 = vunpack.c.h.b16 %v1585
        %v1668 = vunpack.c.l.b16 %v1586
        %v1669 = vunpack.c.h.b16 %v1586
        %v1670 = vunpack.c.l.b16 %v1587
        %v1671 = vunpack.c.h.b16 %v1587
        %v1672 = vunpack.c.l.b16 %v1588
        %v1673 = vunpack.c.h.b16 %v1588
        %v1674 = vunpack.c.l.b16 %v1589
        %v1675 = vunpack.c.h.b16 %v1589
        %v1676 = vunpack.c.l.b16 %v1590
        %v1677 = vunpack.c.h.b16 %v1590
        %v1678 = vunpack.c.l.b16 %v1591
        %v1679 = vunpack.c.h.b16 %v1591
        %v1680 = vunpack.c.l.b16 %v1592
        %v1681 = vunpack.c.h.b16 %v1592
        %v1682 = vunpack.c.l.b16 %v1593
        %v1683 = vunpack.c.h.b16 %v1593
        %v1684 = vunpack.c.l.b16 %v1594
        %v1685 = vunpack.c.h.b16 %v1594
        %v1686 = vunpack.c.l.b16 %v1595
        %v1687 = vunpack.c.h.b16 %v1595
        %v1688 = vunpack.c.l.b16 %v1596
        %v1689 = vunpack.c.h.b16 %v1596
        %v1690 = vunpack.c.l.b16 %v1597
        %v1691 = vunpack.c.h.b16 %v1597
        %v1692 = vunpack.c.l.b16 %v1598
        %v1693 = vunpack.c.h.b16 %v1598
        %v1694 = vunpack.c.l.b16 %v1599
        %v1695 = vunpack.c.h.b16 %v1599
        %v1696 = vunpack.c.l.b16 %v1600
        %v1697 = vunpack.c.h.b16 %v1600
        %v1698 = vunpack.c.l.b16 %v1601
        %v1699 = vunpack.c.h.b16 %v1601
        %v1700 = vunpack.c.l.b16 %v1602
        %v1701 = vunpack.c.h.b16 %v1602
        %v1702 = vunpack.c.l.b16 %v1603
        %v1703 = vunpack.c.h.b16 %v1603
        %v1704 = vunpack.c.l.b16 %v1604
        %v1705 = vunpack.c.h.b16 %v1604
        %v1706 = vunpack.c.l.b16 %v1605
        %v1707 = vunpack.c.h.b16 %v1605
        %v1708 = vunpack.c.l.b16 %v1606
        %v1709 = vunpack.c.h.b16 %v1606
        %v1710 = vpack.c.b16 %v1648, %v1646
        %v1711 = vpack.c.b16 %v1649, %v1647
        %v1712 = vpack.c.b16 %v1652, %v1650
        %v1713 = vpack.c.b16 %v1653, %v1651
        %v1714 = vpack.c.b16 %v1656, %v1654
        %v1715 = vpack.c.b16 %v1657, %v1655
        %v1716 = vpack.c.b16 %v1660, %v1658
        %v1717 = vpack.c.b16 %v1661, %v1659
        %v1718 = vpack.c.b16 %v1664, %v1662
        %v1719 = vpack.c.b16 %v1665, %v1663
        %v1720 = vpack.c.b16 %v1668, %v1666
        %v1721 = vpack.c.b16 %v1669, %v1667
        %v1722 = vpack.c.b16 %v1672, %v1670
        %v1723 = vpack.c.b16 %v1673, %v1671
        %v1724 = vpack.c.b16 %v1676, %v1674
        %v1725 = vpack.c.b16 %v1677, %v1675
        %v1726 = vpack.c.b16 %v1680, %v1678
        %v1727 = vpack.c.b16 %v1681, %v1679
        %v1728 = vpack.c.b16 %v1684, %v1682
        %v1729 = vpack.c.b16 %v1685, %v1683
        %v1730 = vpack.c.b16 %v1688, %v1686
        %v1731 = vpack.c.b16 %v1689, %v1687
        %v1732 = vpack.c.b16 %v1692, %v1690
        %v1733 = vpack.c.b16 %v1693, %v1691
        %v1734 = vpack.c.b16 %v1696, %v1694
        %v1735 = vpack.c.b16 %v1697, %v1695
        %v1736 = vpack.c.b16 %v1700, %v1698
        %v1737 = vpack.c.b16 %v1701, %v1699
        %v1738 = vpack.c.b16 %v1704, %v1702
        %v1739 = vpack.c.b16 %v1705, %v1703
        %v1740 = vpack.c.b16 %v1708, %v1706
        %v1741 = vpack.c.b16 %v1709, %v1707
        %1774 = vmatpush.bf16.msra.mxu0 %v1724
        %1775 = vmatpush.bf16.msra.mxu0 %v1722
        %1776 = vmatpush.bf16.msra.mxu0 %v1720
        %1777 = vmatpush.bf16.msra.mxu0 %v1718
        %1778 = vmatpush.bf16.msra.mxu0 %v1716
        %1779 = vmatpush.bf16.msra.mxu0 %v1714
        %1780 = vmatpush.bf16.msra.mxu0 %v1712
        %1781 = vmatpush.bf16.msra.mxu0 %v1710
        %1782 = vmatmul.bf16.gmra.mxu0 %v1567
        %v1783 = vpop.f32.mrf.mxu0
        %v1784 = vadd.f32 %v1610, %v1783
        %v1785 = vpop.f32.mrf.mxu0
        %v1786 = vadd.f32 %v1610, %v1785
        %1787 = vmatmul.bf16.gmra.mxu0 %v1569
        %v1788 = vpop.f32.mrf.mxu0
        %v1789 = vadd.f32 %v1610, %v1788
        %v1790 = vpop.f32.mrf.mxu0
        %v1791 = vadd.f32 %v1610, %v1790
        %1792 = vmatmul.bf16.gmra.mxu0 %v1571
        %v1793 = vpop.f32.mrf.mxu0
        %v1794 = vadd.f32 %v1610, %v1793
        %v1795 = vpop.f32.mrf.mxu0
        %v1796 = vadd.f32 %v1610, %v1795
        %1797 = vmatmul.bf16.gmra.mxu0 %v1573
        %v1798 = vpop.f32.mrf.mxu0
        %v1799 = vadd.f32 %v1610, %v1798
        %v1800 = vpop.f32.mrf.mxu0
        %v1801 = vadd.f32 %v1610, %v1800
        %1802 = vdwg.mxu0
        %1803 = vmatpush.bf16.msra.mxu0 %v1740
        %1804 = vmatpush.bf16.msra.mxu0 %v1738
        %1805 = vmatpush.bf16.msra.mxu0 %v1736
        %1806 = vmatpush.bf16.msra.mxu0 %v1734
        %1807 = vmatpush.bf16.msra.mxu0 %v1732
        %1808 = vmatpush.bf16.msra.mxu0 %v1730
        %1809 = vmatpush.bf16.msra.mxu0 %v1728
        %1810 = vmatpush.bf16.msra.mxu0 %v1726
        %1811 = vmatmul.bf16.gmra.mxu0 %v1568
        %v1812 = vpop.f32.mrf.mxu0
        %v1813 = vadd.f32 %v1784, %v1812
        %v1814 = vpop.f32.mrf.mxu0
        %v1815 = vadd.f32 %v1786, %v1814
        %1816 = vmatmul.bf16.gmra.mxu0 %v1570
        %v1817 = vpop.f32.mrf.mxu0
        %v1818 = vadd.f32 %v1789, %v1817
        %v1819 = vpop.f32.mrf.mxu0
        %v1820 = vadd.f32 %v1791, %v1819
        %1821 = vmatmul.bf16.gmra.mxu0 %v1572
        %v1822 = vpop.f32.mrf.mxu0
        %v1823 = vadd.f32 %v1794, %v1822
        %v1824 = vpop.f32.mrf.mxu0
        %v1825 = vadd.f32 %v1796, %v1824
        %1826 = vmatmul.bf16.gmra.mxu0 %v1574
        %v1827 = vpop.f32.mrf.mxu0
        %v1828 = vadd.f32 %v1799, %v1827
        %v1829 = vpop.f32.mrf.mxu0
        %v1830 = vadd.f32 %v1801, %v1829
        %1831 = vdwg.mxu0
        %1832 = vmatpush.bf16.msra.mxu0 %v1725
        %1833 = vmatpush.bf16.msra.mxu0 %v1723
        %1834 = vmatpush.bf16.msra.mxu0 %v1721
        %1835 = vmatpush.bf16.msra.mxu0 %v1719
        %1836 = vmatpush.bf16.msra.mxu0 %v1717
        %1837 = vmatpush.bf16.msra.mxu0 %v1715
        %1838 = vmatpush.bf16.msra.mxu0 %v1713
        %1839 = vmatpush.bf16.msra.mxu0 %v1711
        %1840 = vmatmul.bf16.gmra.mxu0 %v1567
        %v1841 = vpop.f32.mrf.mxu0
        %v1842 = vadd.f32 %v1611, %v1841
        %v1843 = vpop.f32.mrf.mxu0
        %v1844 = vadd.f32 %v1611, %v1843
        %1845 = vmatmul.bf16.gmra.mxu0 %v1569
        %v1846 = vpop.f32.mrf.mxu0
        %v1847 = vadd.f32 %v1611, %v1846
        %v1848 = vpop.f32.mrf.mxu0
        %v1849 = vadd.f32 %v1611, %v1848
        %1850 = vmatmul.bf16.gmra.mxu0 %v1571
        %v1851 = vpop.f32.mrf.mxu0
        %v1852 = vadd.f32 %v1611, %v1851
        %v1853 = vpop.f32.mrf.mxu0
        %v1854 = vadd.f32 %v1611, %v1853
        %1855 = vmatmul.bf16.gmra.mxu0 %v1573
        %v1856 = vpop.f32.mrf.mxu0
        %v1857 = vadd.f32 %v1611, %v1856
        %v1858 = vpop.f32.mrf.mxu0
        %v1859 = vadd.f32 %v1611, %v1858
        %1860 = vdwg.mxu0
        %1861 = vmatpush.bf16.msra.mxu0 %v1741
        %1862 = vmatpush.bf16.msra.mxu0 %v1739
        %1863 = vmatpush.bf16.msra.mxu0 %v1737
        %1864 = vmatpush.bf16.msra.mxu0 %v1735
        %1865 = vmatpush.bf16.msra.mxu0 %v1733
        %1866 = vmatpush.bf16.msra.mxu0 %v1731
        %1867 = vmatpush.bf16.msra.mxu0 %v1729
        %1868 = vmatpush.bf16.msra.mxu0 %v1727
        %1869 = vmatmul.bf16.gmra.mxu0 %v1568
        %v1870 = vpop.f32.mrf.mxu0
        %v1871 = vadd.f32 %v1842, %v1870
        %v1872 = vpop.f32.mrf.mxu0
        %v1873 = vadd.f32 %v1844, %v1872
        %1874 = vmatmul.bf16.gmra.mxu0 %v1570
        %v1875 = vpop.f32.mrf.mxu0
        %v1876 = vadd.f32 %v1847, %v1875
        %v1877 = vpop.f32.mrf.mxu0
        %v1878 = vadd.f32 %v1849, %v1877
        %1879 = vmatmul.bf16.gmra.mxu0 %v1572
        %v1880 = vpop.f32.mrf.mxu0
        %v1881 = vadd.f32 %v1852, %v1880
        %v1882 = vpop.f32.mrf.mxu0
        %v1883 = vadd.f32 %v1854, %v1882
        %1884 = vmatmul.bf16.gmra.mxu0 %v1574
        %v1885 = vpop.f32.mrf.mxu0
        %v1886 = vadd.f32 %v1857, %v1885
        %v1887 = vpop.f32.mrf.mxu0
        %v1888 = vadd.f32 %v1859, %v1887
        %1889 = vdwg.mxu0
        %v1890 = vadd.f32 %v1813, %v1815
        %v1891 = vrot.slane %v1890, 4
        %v1892 = vadd.f32 %v1890, %v1891
        %v1893 = vrot.slane %v1892, 2
        %v1894 = vadd.f32 %v1892, %v1893
        %v1895 = vrot.slane %v1894, 1
        %v1896 = vadd.f32 %v1894, %v1895
        %v1897 = vadd.f32 %v1871, %v1873
        %v1898 = vrot.slane %v1897, 4
        %v1899 = vadd.f32 %v1897, %v1898
        %v1900 = vrot.slane %v1899, 2
        %v1901 = vadd.f32 %v1899, %v1900
        %v1902 = vrot.slane %v1901, 1
        %v1903 = vadd.f32 %v1901, %v1902
        %v1904 = vadd.f32 %v1818, %v1820
        %v1905 = vrot.slane %v1904, 4
        %v1906 = vadd.f32 %v1904, %v1905
        %v1907 = vrot.slane %v1906, 2
        %v1908 = vadd.f32 %v1906, %v1907
        %v1909 = vrot.slane %v1908, 1
        %v1910 = vadd.f32 %v1908, %v1909
        %v1911 = vadd.f32 %v1876, %v1878
        %v1912 = vrot.slane %v1911, 4
        %v1913 = vadd.f32 %v1911, %v1912
        %v1914 = vrot.slane %v1913, 2
        %v1915 = vadd.f32 %v1913, %v1914
        %v1916 = vrot.slane %v1915, 1
        %v1917 = vadd.f32 %v1915, %v1916
        %v1918 = vadd.f32 %v1823, %v1825
        %v1919 = vrot.slane %v1918, 4
        %v1920 = vadd.f32 %v1918, %v1919
        %v1921 = vrot.slane %v1920, 2
        %v1922 = vadd.f32 %v1920, %v1921
        %v1923 = vrot.slane %v1922, 1
        %v1924 = vadd.f32 %v1922, %v1923
        %v1925 = vadd.f32 %v1881, %v1883
        %v1926 = vrot.slane %v1925, 4
        %v1927 = vadd.f32 %v1925, %v1926
        %v1928 = vrot.slane %v1927, 2
        %v1929 = vadd.f32 %v1927, %v1928
        %v1930 = vrot.slane %v1929, 1
        %v1931 = vadd.f32 %v1929, %v1930
        %v1932 = vadd.f32 %v1828, %v1830
        %v1933 = vrot.slane %v1932, 4
        %v1934 = vadd.f32 %v1932, %v1933
        %v1935 = vrot.slane %v1934, 2
        %v1936 = vadd.f32 %v1934, %v1935
        %v1937 = vrot.slane %v1936, 1
        %v1938 = vadd.f32 %v1936, %v1937
        %v1939 = vadd.f32 %v1886, %v1888
        %v1940 = vrot.slane %v1939, 4
        %v1941 = vadd.f32 %v1939, %v1940
        %v1942 = vrot.slane %v1941, 2
        %v1943 = vadd.f32 %v1941, %v1942
        %v1944 = vrot.slane %v1943, 1
        %v1945 = vadd.f32 %v1943, %v1944
        %v1946 = vld [vmem:[%s3] sm:$0xff]
        %v1947 = vld [vmem:[%s3 + $0x8] sm:$0xff]
        %v1948 = vld [vmem:[%s3 + $0x10] sm:$0xff]
        %v1949 = vld [vmem:[%s3 + $0x18] sm:$0xff]
        %v1950 = vld [vmem:[%s3 + $0x20] sm:$0xff]
        %v1951 = vld [vmem:[%s3 + $0x28] sm:$0xff]
        %v1952 = vld [vmem:[%s3 + $0x30] sm:$0xff]
        %v1953 = vld [vmem:[%s3 + $0x38] sm:$0xff]
        %v1954 = vld [vmem:[%s3 + $0x40] sm:$0xff]
        %v1955 = vld [vmem:[%s3 + $0x48] sm:$0xff]
        %v1956 = vld [vmem:[%s3 + $0x50] sm:$0xff]
        %v1957 = vld [vmem:[%s3 + $0x58] sm:$0xff]
        %v1958 = vld [vmem:[%s3 + $0x60] sm:$0xff]
        %v1959 = vld [vmem:[%s3 + $0x68] sm:$0xff]
        %v1960 = vld [vmem:[%s3 + $0x70] sm:$0xff]
        %v1961 = vld [vmem:[%s3 + $0x78] sm:$0xff]
        %v1962 = vld [vmem:[%s3 + $0x80] sm:$0xff]
        %v1963 = vld [vmem:[%s3 + $0x88] sm:$0xff]
        %v1964 = vld [vmem:[%s3 + $0x90] sm:$0xff]
        %v1965 = vld [vmem:[%s3 + $0x98] sm:$0xff]
        %v1966 = vld [vmem:[%s3 + $0xa0] sm:$0xff]
        %v1967 = vld [vmem:[%s3 + $0xa8] sm:$0xff]
        %v1968 = vld [vmem:[%s3 + $0xb0] sm:$0xff]
        %v1969 = vld [vmem:[%s3 + $0xb8] sm:$0xff]
        %v1970 = vld [vmem:[%s3 + $0xc0] sm:$0xff]
        %v1971 = vld [vmem:[%s3 + $0xc8] sm:$0xff]
        %v1972 = vld [vmem:[%s3 + $0xd0] sm:$0xff]
        %v1973 = vld [vmem:[%s3 + $0xd8] sm:$0xff]
        %v1974 = vld [vmem:[%s3 + $0xe0] sm:$0xff]
        %v1975 = vld [vmem:[%s3 + $0xe8] sm:$0xff]
        %v1976 = vld [vmem:[%s3 + $0xf0] sm:$0xff]
        %v1977 = vld [vmem:[%s3 + $0xf8] sm:$0xff]
        %vm1986 = vcmask 1041409
        %v1987 = vsel %vm1986, %v1910, %v1896
        %vm1988 = vcmask 1042434
        %v1989 = vsel %vm1988, %v1924, %v1987
        %vm1990 = vcmask 1043459
        %v1991 = vsel %vm1990, %v1938, %v1989
        %v1992 = vsel %vm1986, %v1917, %v1903
        %v1993 = vsel %vm1988, %v1931, %v1992
        %v1994 = vsel %vm1990, %v1945, %v1993
        %1997 = vmatpush.msra.mxu0 %v1961
        %1998 = vmatpush.msra.mxu0 %v1960
        %1999 = vmatpush.msra.mxu0 %v1959
        %2000 = vmatpush.msra.mxu0 %v1958
        %2001 = vmatpush.msra.mxu0 %v1957
        %2002 = vmatpush.msra.mxu0 %v1956
        %2003 = vmatpush.msra.mxu0 %v1955
        %2004 = vmatpush.msra.mxu0 %v1954
        %2005 = vmatpush.msra.mxu0 %v1953
        %2006 = vmatpush.msra.mxu0 %v1952
        %2007 = vmatpush.msra.mxu0 %v1951
        %2008 = vmatpush.msra.mxu0 %v1950
        %2009 = vmatpush.msra.mxu0 %v1949
        %2010 = vmatpush.msra.mxu0 %v1948
        %2011 = vmatpush.msra.mxu0 %v1947
        %2012 = vmatpush.msra.mxu0 %v1946
        %2013 = vmatmul.f32.gmra.mxu0 %v1991
        %v2014 = vpop.f32.mrf.mxu0
        %v2015 = vadd.f32 0.0, %v2014
        %2016 = vdwg.mxu0
        %2017 = vmatpush.msra.mxu0 %v1977
        %2018 = vmatpush.msra.mxu0 %v1976
        %2019 = vmatpush.msra.mxu0 %v1975
        %2020 = vmatpush.msra.mxu0 %v1974
        %2021 = vmatpush.msra.mxu0 %v1973
        %2022 = vmatpush.msra.mxu0 %v1972
        %2023 = vmatpush.msra.mxu0 %v1971
        %2024 = vmatpush.msra.mxu0 %v1970
        %2025 = vmatpush.msra.mxu0 %v1969
        %2026 = vmatpush.msra.mxu0 %v1968
        %2027 = vmatpush.msra.mxu0 %v1967
        %2028 = vmatpush.msra.mxu0 %v1966
        %2029 = vmatpush.msra.mxu0 %v1965
        %2030 = vmatpush.msra.mxu0 %v1964
        %2031 = vmatpush.msra.mxu0 %v1963
        %2032 = vmatpush.msra.mxu0 %v1962
        %2033 = vmatmul.f32.gmra.mxu0 %v1994
        %v2034 = vpop.f32.mrf.mxu0
        %v2035 = vadd.f32 %v2015, %v2034
        %2036 = vdwg.mxu0
        %v2037 = vxor.u32 %v2035, 2147483648
        %v2038 = vmul.f32 %v2037, 1.442695
        %v2039 = vpow.pop %v2038
        %v2040 = vadd.f32 %v2039, 1.0
        %v2041 = vrcp.pop %v2040
        %v2042 = vmul.f32 %v2040, %v2041
        %v2043 = vsub.f32 1.0, %v2042
        %v2044 = vmul.f32 %v2041, %v2043
        %v2045 = vadd.f32 %v2041, %v2044
        %vm2046 = vweird.f32 %v2040
        %vm2047 = vweird.f32 %v2041
        %vm2048 = vmor %vm2046, %vm2047
        %v2049 = vsel %vm2048, %v2041, %v2045
        %v2050 = vand.u32 2147483647, %v2040
        %vm2051 = vcmp.eq.f32.partialorder %v2050, 8.507059e+37
        %v2052 = vand.u32 %v2040, 2147483648
        %v2053 = vor.u32 1.1754944e-38, %v2052
        %v2054 = vsel %vm2051, %v2053, %v2049
        %v2055 = vmul.f32 1.0, %v2054
        %v2056 = vmul.f32 %v2035, %v2055
        %v2057 = vld [vmem:[#allocation5 + $0x10] sm:$0x78]
        %v2058 = vld [vmem:[#allocation5 + $0x18] sm:$0x78]
        %v2061 = vrot.slane %v2057, 3
        %v2062 = vrot.slane %v2058, 3
        %vm2063 = vcmask 31744
        %v2065 = vsel %vm2063, %v2056, 0
        %vm2067 = vcmask 1043456
        %v2068 = vsel %vm2067, %v2061, 0
        %v2070 = vsel %vm2067, %v2062, 0
        %2072 = vmatpush.msra.mxu0 0.0
        %2073 = vmatpush.msra.mxu0 0.0
        %2074 = vmatpush.msra.mxu0 0.0
        %2075 = vmatpush.msra.mxu0 0.0
        %2076 = vmatpush.msra.mxu0 0.0
        %2077 = vmatpush.msra.mxu0 0.0
        %2078 = vmatpush.msra.mxu0 0.0
        %2079 = vmatpush.msra.mxu0 0.0
        %2080 = vmatpush.msra.mxu0 0.0
        %2081 = vmatpush.msra.mxu0 0.0
        %2082 = vmatpush.msra.mxu0 0.0
        %2083 = vmatpush.msra.mxu0 0.0
        %2084 = vmatpush.msra.mxu0 0.0
        %2085 = vmatpush.msra.mxu0 0.0
        %2086 = vmatpush.msra.mxu0 0.0
        %2087 = vmatpush.msra.mxu0 %v2068
        %2088 = vmatmul.f32.gmra.mxu0 %v2065
        %v2089 = vpop.f32.mrf.mxu0
        %v2090 = vadd.f32 0.0, %v2089
        %2091 = vdwg.mxu0
        %2092 = vmatpush.msra.mxu0 0.0
        %2093 = vmatpush.msra.mxu0 0.0
        %2094 = vmatpush.msra.mxu0 0.0
        %2095 = vmatpush.msra.mxu0 0.0
        %2096 = vmatpush.msra.mxu0 0.0
        %2097 = vmatpush.msra.mxu0 0.0
        %2098 = vmatpush.msra.mxu0 0.0
        %2099 = vmatpush.msra.mxu0 0.0
        %2100 = vmatpush.msra.mxu0 0.0
        %2101 = vmatpush.msra.mxu0 0.0
        %2102 = vmatpush.msra.mxu0 0.0
        %2103 = vmatpush.msra.mxu0 0.0
        %2104 = vmatpush.msra.mxu0 0.0
        %2105 = vmatpush.msra.mxu0 0.0
        %2106 = vmatpush.msra.mxu0 0.0
        %2107 = vmatpush.msra.mxu0 %v2070
        %2108 = vmatmul.f32.gmra.mxu0 %v2065
        %v2109 = vpop.f32.mrf.mxu0
        %v2110 = vadd.f32 0.0, %v2109
        %2111 = vdwg.mxu0
        %v2112 = vxor.u32 %v2090, 2147483648
        %v2113 = vxor.u32 %v2110, 2147483648
        %v2114 = vmul.f32 %v2112, 1.442695
        %v2115 = vpow.pop %v2114
        %v2116 = vmul.f32 %v2113, 1.442695
        %v2117 = vpow.pop %v2116
        %v2118 = vadd.f32 %v2115, 1.0
        %v2119 = vadd.f32 %v2117, 1.0
        %v2120 = vrcp.pop %v2118
        %v2121 = vmul.f32 %v2118, %v2120
        %v2122 = vsub.f32 1.0, %v2121
        %v2123 = vmul.f32 %v2120, %v2122
        %v2124 = vadd.f32 %v2120, %v2123
        %vm2125 = vweird.f32 %v2118
        %vm2126 = vweird.f32 %v2120
        %vm2127 = vmor %vm2125, %vm2126
        %v2128 = vsel %vm2127, %v2120, %v2124
        %v2129 = vand.u32 2147483647, %v2118
        %vm2130 = vcmp.eq.f32.partialorder %v2129, 8.507059e+37
        %v2131 = vand.u32 %v2118, 2147483648
        %v2132 = vor.u32 1.1754944e-38, %v2131
        %v2133 = vsel %vm2130, %v2132, %v2128
        %v2134 = vmul.f32 1.0, %v2133
        %v2135 = vrcp.pop %v2119
        %v2136 = vmul.f32 %v2119, %v2135
        %v2137 = vsub.f32 1.0, %v2136
        %v2138 = vmul.f32 %v2135, %v2137
        %v2139 = vadd.f32 %v2135, %v2138
        %vm2140 = vweird.f32 %v2119
        %vm2141 = vweird.f32 %v2135
        %vm2142 = vmor %vm2140, %vm2141
        %v2143 = vsel %vm2142, %v2135, %v2139
        %v2144 = vand.u32 2147483647, %v2119
        %vm2145 = vcmp.eq.f32.partialorder %v2144, 8.507059e+37
        %v2146 = vand.u32 %v2119, 2147483648
        %v2147 = vor.u32 1.1754944e-38, %v2146
        %v2148 = vsel %vm2145, %v2147, %v2143
        %v2149 = vmul.f32 1.0, %v2148
        %v2152 = vrot.slane %v2149, 7
        %vm2153 = vcmask 1040384
        %v2154 = vsel %vm2153, %v2134, %v2152
        %v2155 = vsel %vm1986, %v2134, %v2152
        %v2156 = vrot.slane %v2155, 1
        %v2157 = vsel %vm1988, %v2134, %v2152
        %v2158 = vrot.slane %v2157, 2
        %v2159 = vsel %vm1990, %v2134, %v2152
        %v2160 = vrot.slane %v2159, 3
        %v2161 = vperm.slane %v2154, 0
        %v2162 = vperm.slane %v2154, 1
        %v2163 = vperm.slane %v2156, 0
        %v2164 = vperm.slane %v2156, 1
        %v2165 = vperm.slane %v2158, 0
        %v2166 = vperm.slane %v2158, 1
        %v2167 = vperm.slane %v2160, 0
        %v2168 = vperm.slane %v2160, 1
        %v2177 = vmul.f32 %v1813, %v2161
        %v2178 = vmul.f32 %v1871, %v2162
        %v2179 = vmul.f32 %v1815, %v2161
        %v2180 = vmul.f32 %v1873, %v2162
        %v2181 = vmul.f32 %v1818, %v2163
        %v2182 = vmul.f32 %v1876, %v2164
        %v2183 = vmul.f32 %v1820, %v2163
        %v2184 = vmul.f32 %v1878, %v2164
        %v2185 = vmul.f32 %v1823, %v2165
        %v2186 = vmul.f32 %v1881, %v2166
        %v2187 = vmul.f32 %v1825, %v2165
        %v2188 = vmul.f32 %v1883, %v2166
        %v2189 = vmul.f32 %v1828, %v2167
        %v2190 = vmul.f32 %v1886, %v2168
        %v2191 = vmul.f32 %v1830, %v2167
        %v2192 = vmul.f32 %v1888, %v2168
        %v2193 = vadd.f32 %v246, %v2177
        %v2194 = vadd.f32 %v247, %v2178
        %v2195 = vadd.f32 %v248, %v2179
        %v2196 = vadd.f32 %v249, %v2180
        %v2197 = vadd.f32 %v250, %v2181
        %v2198 = vadd.f32 %v251, %v2182
        %v2199 = vadd.f32 %v252, %v2183
        %v2200 = vadd.f32 %v253, %v2184
        %v2201 = vadd.f32 %v254, %v2185
        %v2202 = vadd.f32 %v255, %v2186
        %v2203 = vadd.f32 %v256, %v2187
        %v2204 = vadd.f32 %v257, %v2188
        %v2205 = vadd.f32 %v258, %v2189
        %v2206 = vadd.f32 %v259, %v2190
        %v2207 = vadd.f32 %v260, %v2191
        %v2208 = vadd.f32 %v261, %v2192
        %v2209 = vxor.u32 %v2193, 2147483648
        %v2210 = vxor.u32 %v2194, 2147483648
        %v2211 = vxor.u32 %v2195, 2147483648
        %v2212 = vxor.u32 %v2196, 2147483648
        %v2213 = vxor.u32 %v2197, 2147483648
        %v2214 = vxor.u32 %v2198, 2147483648
        %v2215 = vxor.u32 %v2199, 2147483648
        %v2216 = vxor.u32 %v2200, 2147483648
        %v2217 = vxor.u32 %v2201, 2147483648
        %v2218 = vxor.u32 %v2202, 2147483648
        %v2219 = vxor.u32 %v2203, 2147483648
        %v2220 = vxor.u32 %v2204, 2147483648
        %v2221 = vxor.u32 %v2205, 2147483648
        %v2222 = vxor.u32 %v2206, 2147483648
        %v2223 = vxor.u32 %v2207, 2147483648
        %v2224 = vxor.u32 %v2208, 2147483648
        %v2225 = vmul.f32 %v2209, 1.442695
        %v2226 = vpow.pop %v2225
        %v2227 = vmul.f32 %v2210, 1.442695
        %v2228 = vpow.pop %v2227
        %v2229 = vmul.f32 %v2211, 1.442695
        %v2230 = vpow.pop %v2229
        %v2231 = vmul.f32 %v2212, 1.442695
        %v2232 = vpow.pop %v2231
        %v2233 = vmul.f32 %v2213, 1.442695
        %v2234 = vpow.pop %v2233
        %v2235 = vmul.f32 %v2214, 1.442695
        %v2236 = vpow.pop %v2235
        %v2237 = vmul.f32 %v2215, 1.442695
        %v2238 = vpow.pop %v2237
        %v2239 = vmul.f32 %v2216, 1.442695
        %v2240 = vpow.pop %v2239
        %v2241 = vmul.f32 %v2217, 1.442695
        %v2242 = vpow.pop %v2241
        %v2243 = vmul.f32 %v2218, 1.442695
        %v2244 = vpow.pop %v2243
        %v2245 = vmul.f32 %v2219, 1.442695
        %v2246 = vpow.pop %v2245
        %v2247 = vmul.f32 %v2220, 1.442695
        %v2248 = vpow.pop %v2247
        %v2249 = vmul.f32 %v2221, 1.442695
        %v2250 = vpow.pop %v2249
        %v2251 = vmul.f32 %v2222, 1.442695
        %v2252 = vpow.pop %v2251
        %v2253 = vmul.f32 %v2223, 1.442695
        %v2254 = vpow.pop %v2253
        %v2255 = vmul.f32 %v2224, 1.442695
        %v2256 = vpow.pop %v2255
        %v2257 = vadd.f32 %v2226, 1.0
        %v2258 = vadd.f32 %v2228, 1.0
        %v2259 = vadd.f32 %v2230, 1.0
        %v2260 = vadd.f32 %v2232, 1.0
        %v2261 = vadd.f32 %v2234, 1.0
        %v2262 = vadd.f32 %v2236, 1.0
        %v2263 = vadd.f32 %v2238, 1.0
        %v2264 = vadd.f32 %v2240, 1.0
        %v2265 = vadd.f32 %v2242, 1.0
        %v2266 = vadd.f32 %v2244, 1.0
        %v2267 = vadd.f32 %v2246, 1.0
        %v2268 = vadd.f32 %v2248, 1.0
        %v2269 = vadd.f32 %v2250, 1.0
        %v2270 = vadd.f32 %v2252, 1.0
        %v2271 = vadd.f32 %v2254, 1.0
        %v2272 = vadd.f32 %v2256, 1.0
        %v2273 = vrcp.pop %v2257
        %v2274 = vmul.f32 %v2257, %v2273
        %v2275 = vsub.f32 1.0, %v2274
        %v2276 = vmul.f32 %v2273, %v2275
        %v2277 = vadd.f32 %v2273, %v2276
        %vm2278 = vweird.f32 %v2257
        %vm2279 = vweird.f32 %v2273
        %vm2280 = vmor %vm2278, %vm2279
        %v2281 = vsel %vm2280, %v2273, %v2277
        %v2282 = vand.u32 2147483647, %v2257
        %vm2283 = vcmp.eq.f32.partialorder %v2282, 8.507059e+37
        %v2284 = vand.u32 %v2257, 2147483648
        %v2285 = vor.u32 1.1754944e-38, %v2284
        %v2286 = vsel %vm2283, %v2285, %v2281
        %v2287 = vmul.f32 1.0, %v2286
        %v2288 = vrcp.pop %v2258
        %v2289 = vmul.f32 %v2258, %v2288
        %v2290 = vsub.f32 1.0, %v2289
        %v2291 = vmul.f32 %v2288, %v2290
        %v2292 = vadd.f32 %v2288, %v2291
        %vm2293 = vweird.f32 %v2258
        %vm2294 = vweird.f32 %v2288
        %vm2295 = vmor %vm2293, %vm2294
        %v2296 = vsel %vm2295, %v2288, %v2292
        %v2297 = vand.u32 2147483647, %v2258
        %vm2298 = vcmp.eq.f32.partialorder %v2297, 8.507059e+37
        %v2299 = vand.u32 %v2258, 2147483648
        %v2300 = vor.u32 1.1754944e-38, %v2299
        %v2301 = vsel %vm2298, %v2300, %v2296
        %v2302 = vmul.f32 1.0, %v2301
        %v2303 = vrcp.pop %v2259
        %v2304 = vmul.f32 %v2259, %v2303
        %v2305 = vsub.f32 1.0, %v2304
        %v2306 = vmul.f32 %v2303, %v2305
        %v2307 = vadd.f32 %v2303, %v2306
        %vm2308 = vweird.f32 %v2259
        %vm2309 = vweird.f32 %v2303
        %vm2310 = vmor %vm2308, %vm2309
        %v2311 = vsel %vm2310, %v2303, %v2307
        %v2312 = vand.u32 2147483647, %v2259
        %vm2313 = vcmp.eq.f32.partialorder %v2312, 8.507059e+37
        %v2314 = vand.u32 %v2259, 2147483648
        %v2315 = vor.u32 1.1754944e-38, %v2314
        %v2316 = vsel %vm2313, %v2315, %v2311
        %v2317 = vmul.f32 1.0, %v2316
        %v2318 = vrcp.pop %v2260
        %v2319 = vmul.f32 %v2260, %v2318
        %v2320 = vsub.f32 1.0, %v2319
        %v2321 = vmul.f32 %v2318, %v2320
        %v2322 = vadd.f32 %v2318, %v2321
        %vm2323 = vweird.f32 %v2260
        %vm2324 = vweird.f32 %v2318
        %vm2325 = vmor %vm2323, %vm2324
        %v2326 = vsel %vm2325, %v2318, %v2322
        %v2327 = vand.u32 2147483647, %v2260
        %vm2328 = vcmp.eq.f32.partialorder %v2327, 8.507059e+37
        %v2329 = vand.u32 %v2260, 2147483648
        %v2330 = vor.u32 1.1754944e-38, %v2329
        %v2331 = vsel %vm2328, %v2330, %v2326
        %v2332 = vmul.f32 1.0, %v2331
        %v2333 = vrcp.pop %v2261
        %v2334 = vmul.f32 %v2261, %v2333
        %v2335 = vsub.f32 1.0, %v2334
        %v2336 = vmul.f32 %v2333, %v2335
        %v2337 = vadd.f32 %v2333, %v2336
        %vm2338 = vweird.f32 %v2261
        %vm2339 = vweird.f32 %v2333
        %vm2340 = vmor %vm2338, %vm2339
        %v2341 = vsel %vm2340, %v2333, %v2337
        %v2342 = vand.u32 2147483647, %v2261
        %vm2343 = vcmp.eq.f32.partialorder %v2342, 8.507059e+37
        %v2344 = vand.u32 %v2261, 2147483648
        %v2345 = vor.u32 1.1754944e-38, %v2344
        %v2346 = vsel %vm2343, %v2345, %v2341
        %v2347 = vmul.f32 1.0, %v2346
        %v2348 = vrcp.pop %v2262
        %v2349 = vmul.f32 %v2262, %v2348
        %v2350 = vsub.f32 1.0, %v2349
        %v2351 = vmul.f32 %v2348, %v2350
        %v2352 = vadd.f32 %v2348, %v2351
        %vm2353 = vweird.f32 %v2262
        %vm2354 = vweird.f32 %v2348
        %vm2355 = vmor %vm2353, %vm2354
        %v2356 = vsel %vm2355, %v2348, %v2352
        %v2357 = vand.u32 2147483647, %v2262
        %vm2358 = vcmp.eq.f32.partialorder %v2357, 8.507059e+37
        %v2359 = vand.u32 %v2262, 2147483648
        %v2360 = vor.u32 1.1754944e-38, %v2359
        %v2361 = vsel %vm2358, %v2360, %v2356
        %v2362 = vmul.f32 1.0, %v2361
        %v2363 = vrcp.pop %v2263
        %v2364 = vmul.f32 %v2263, %v2363
        %v2365 = vsub.f32 1.0, %v2364
        %v2366 = vmul.f32 %v2363, %v2365
        %v2367 = vadd.f32 %v2363, %v2366
        %vm2368 = vweird.f32 %v2263
        %vm2369 = vweird.f32 %v2363
        %vm2370 = vmor %vm2368, %vm2369
        %v2371 = vsel %vm2370, %v2363, %v2367
        %v2372 = vand.u32 2147483647, %v2263
        %vm2373 = vcmp.eq.f32.partialorder %v2372, 8.507059e+37
        %v2374 = vand.u32 %v2263, 2147483648
        %v2375 = vor.u32 1.1754944e-38, %v2374
        %v2376 = vsel %vm2373, %v2375, %v2371
        %v2377 = vmul.f32 1.0, %v2376
        %v2378 = vrcp.pop %v2264
        %v2379 = vmul.f32 %v2264, %v2378
        %v2380 = vsub.f32 1.0, %v2379
        %v2381 = vmul.f32 %v2378, %v2380
        %v2382 = vadd.f32 %v2378, %v2381
        %vm2383 = vweird.f32 %v2264
        %vm2384 = vweird.f32 %v2378
        %vm2385 = vmor %vm2383, %vm2384
        %v2386 = vsel %vm2385, %v2378, %v2382
        %v2387 = vand.u32 2147483647, %v2264
        %vm2388 = vcmp.eq.f32.partialorder %v2387, 8.507059e+37
        %v2389 = vand.u32 %v2264, 2147483648
        %v2390 = vor.u32 1.1754944e-38, %v2389
        %v2391 = vsel %vm2388, %v2390, %v2386
        %v2392 = vmul.f32 1.0, %v2391
        %v2393 = vrcp.pop %v2265
        %v2394 = vmul.f32 %v2265, %v2393
        %v2395 = vsub.f32 1.0, %v2394
        %v2396 = vmul.f32 %v2393, %v2395
        %v2397 = vadd.f32 %v2393, %v2396
        %vm2398 = vweird.f32 %v2265
        %vm2399 = vweird.f32 %v2393
        %vm2400 = vmor %vm2398, %vm2399
        %v2401 = vsel %vm2400, %v2393, %v2397
        %v2402 = vand.u32 2147483647, %v2265
        %vm2403 = vcmp.eq.f32.partialorder %v2402, 8.507059e+37
        %v2404 = vand.u32 %v2265, 2147483648
        %v2405 = vor.u32 1.1754944e-38, %v2404
        %v2406 = vsel %vm2403, %v2405, %v2401
        %v2407 = vmul.f32 1.0, %v2406
        %v2408 = vrcp.pop %v2266
        %v2409 = vmul.f32 %v2266, %v2408
        %v2410 = vsub.f32 1.0, %v2409
        %v2411 = vmul.f32 %v2408, %v2410
        %v2412 = vadd.f32 %v2408, %v2411
        %vm2413 = vweird.f32 %v2266
        %vm2414 = vweird.f32 %v2408
        %vm2415 = vmor %vm2413, %vm2414
        %v2416 = vsel %vm2415, %v2408, %v2412
        %v2417 = vand.u32 2147483647, %v2266
        %vm2418 = vcmp.eq.f32.partialorder %v2417, 8.507059e+37
        %v2419 = vand.u32 %v2266, 2147483648
        %v2420 = vor.u32 1.1754944e-38, %v2419
        %v2421 = vsel %vm2418, %v2420, %v2416
        %v2422 = vmul.f32 1.0, %v2421
        %v2423 = vrcp.pop %v2267
        %v2424 = vmul.f32 %v2267, %v2423
        %v2425 = vsub.f32 1.0, %v2424
        %v2426 = vmul.f32 %v2423, %v2425
        %v2427 = vadd.f32 %v2423, %v2426
        %vm2428 = vweird.f32 %v2267
        %vm2429 = vweird.f32 %v2423
        %vm2430 = vmor %vm2428, %vm2429
        %v2431 = vsel %vm2430, %v2423, %v2427
        %v2432 = vand.u32 2147483647, %v2267
        %vm2433 = vcmp.eq.f32.partialorder %v2432, 8.507059e+37
        %v2434 = vand.u32 %v2267, 2147483648
        %v2435 = vor.u32 1.1754944e-38, %v2434
        %v2436 = vsel %vm2433, %v2435, %v2431
        %v2437 = vmul.f32 1.0, %v2436
        %v2438 = vrcp.pop %v2268
        %v2439 = vmul.f32 %v2268, %v2438
        %v2440 = vsub.f32 1.0, %v2439
        %v2441 = vmul.f32 %v2438, %v2440
        %v2442 = vadd.f32 %v2438, %v2441
        %vm2443 = vweird.f32 %v2268
        %vm2444 = vweird.f32 %v2438
        %vm2445 = vmor %vm2443, %vm2444
        %v2446 = vsel %vm2445, %v2438, %v2442
        %v2447 = vand.u32 2147483647, %v2268
        %vm2448 = vcmp.eq.f32.partialorder %v2447, 8.507059e+37
        %v2449 = vand.u32 %v2268, 2147483648
        %v2450 = vor.u32 1.1754944e-38, %v2449
        %v2451 = vsel %vm2448, %v2450, %v2446
        %v2452 = vmul.f32 1.0, %v2451
        %v2453 = vrcp.pop %v2269
        %v2454 = vmul.f32 %v2269, %v2453
        %v2455 = vsub.f32 1.0, %v2454
        %v2456 = vmul.f32 %v2453, %v2455
        %v2457 = vadd.f32 %v2453, %v2456
        %vm2458 = vweird.f32 %v2269
        %vm2459 = vweird.f32 %v2453
        %vm2460 = vmor %vm2458, %vm2459
        %v2461 = vsel %vm2460, %v2453, %v2457
        %v2462 = vand.u32 2147483647, %v2269
        %vm2463 = vcmp.eq.f32.partialorder %v2462, 8.507059e+37
        %v2464 = vand.u32 %v2269, 2147483648
        %v2465 = vor.u32 1.1754944e-38, %v2464
        %v2466 = vsel %vm2463, %v2465, %v2461
        %v2467 = vmul.f32 1.0, %v2466
        %v2468 = vrcp.pop %v2270
        %v2469 = vmul.f32 %v2270, %v2468
        %v2470 = vsub.f32 1.0, %v2469
        %v2471 = vmul.f32 %v2468, %v2470
        %v2472 = vadd.f32 %v2468, %v2471
        %vm2473 = vweird.f32 %v2270
        %vm2474 = vweird.f32 %v2468
        %vm2475 = vmor %vm2473, %vm2474
        %v2476 = vsel %vm2475, %v2468, %v2472
        %v2477 = vand.u32 2147483647, %v2270
        %vm2478 = vcmp.eq.f32.partialorder %v2477, 8.507059e+37
        %v2479 = vand.u32 %v2270, 2147483648
        %v2480 = vor.u32 1.1754944e-38, %v2479
        %v2481 = vsel %vm2478, %v2480, %v2476
        %v2482 = vmul.f32 1.0, %v2481
        %v2483 = vrcp.pop %v2271
        %v2484 = vmul.f32 %v2271, %v2483
        %v2485 = vsub.f32 1.0, %v2484
        %v2486 = vmul.f32 %v2483, %v2485
        %v2487 = vadd.f32 %v2483, %v2486
        %vm2488 = vweird.f32 %v2271
        %vm2489 = vweird.f32 %v2483
        %vm2490 = vmor %vm2488, %vm2489
        %v2491 = vsel %vm2490, %v2483, %v2487
        %v2492 = vand.u32 2147483647, %v2271
        %vm2493 = vcmp.eq.f32.partialorder %v2492, 8.507059e+37
        %v2494 = vand.u32 %v2271, 2147483648
        %v2495 = vor.u32 1.1754944e-38, %v2494
        %v2496 = vsel %vm2493, %v2495, %v2491
        %v2497 = vmul.f32 1.0, %v2496
        %v2498 = vrcp.pop %v2272
        %v2499 = vmul.f32 %v2272, %v2498
        %v2500 = vsub.f32 1.0, %v2499
        %v2501 = vmul.f32 %v2498, %v2500
        %v2502 = vadd.f32 %v2498, %v2501
        %vm2503 = vweird.f32 %v2272
        %vm2504 = vweird.f32 %v2498
        %vm2505 = vmor %vm2503, %vm2504
        %v2506 = vsel %vm2505, %v2498, %v2502
        %v2507 = vand.u32 2147483647, %v2272
        %vm2508 = vcmp.eq.f32.partialorder %v2507, 8.507059e+37
        %v2509 = vand.u32 %v2272, 2147483648
        %v2510 = vor.u32 1.1754944e-38, %v2509
        %v2511 = vsel %vm2508, %v2510, %v2506
        %v2512 = vmul.f32 1.0, %v2511
        %v2513 = vmul.f32 %v2193, %v2287
        %v2514 = vmul.f32 %v2194, %v2302
        %v2515 = vmul.f32 %v2195, %v2317
        %v2516 = vmul.f32 %v2196, %v2332
        %v2517 = vmul.f32 %v2197, %v2347
        %v2518 = vmul.f32 %v2198, %v2362
        %v2519 = vmul.f32 %v2199, %v2377
        %v2520 = vmul.f32 %v2200, %v2392
        %v2521 = vmul.f32 %v2201, %v2407
        %v2522 = vmul.f32 %v2202, %v2422
        %v2523 = vmul.f32 %v2203, %v2437
        %v2524 = vmul.f32 %v2204, %v2452
        %v2525 = vmul.f32 %v2205, %v2467
        %v2526 = vmul.f32 %v2206, %v2482
        %v2527 = vmul.f32 %v2207, %v2497
        %v2528 = vmul.f32 %v2208, %v2512
        %v2529 = vpack.c.bf16 %v2514, %v2513
        %v2530 = vpack.c.bf16 %v2516, %v2515
        %v2531 = vpack.c.bf16 %v2518, %v2517
        %v2532 = vpack.c.bf16 %v2520, %v2519
        %v2533 = vpack.c.bf16 %v2522, %v2521
        %v2534 = vpack.c.bf16 %v2524, %v2523
        %v2535 = vpack.c.bf16 %v2526, %v2525
        %v2536 = vpack.c.bf16 %v2528, %v2527
        %2537 = vst [vmem:[%s235] sm:$0xff] %v2529
        %2538 = vst [vmem:[%s235 + $0x8] sm:$0xff] %v2530
        %2539 = vst [vmem:[%s235 + $0x10] sm:$0xff] %v2531
        %2540 = vst [vmem:[%s235 + $0x18] sm:$0xff] %v2532
        %2541 = vst [vmem:[%s235 + $0x20] sm:$0xff] %v2533
        %2542 = vst [vmem:[%s235 + $0x28] sm:$0xff] %v2534
        %2543 = vst [vmem:[%s235 + $0x30] sm:$0xff] %v2535
        %2544 = vst [vmem:[%s235 + $0x38] sm:$0xff] %v2536
        %s2545 = sand.u32 %s119, 1
        %s2546 = scalar_lea.sflag [#allocation4], %s2545
        %s2547 = sand.u32 %s119, 1
        %s2548 = smul.addr %s2547, 64
        %s2549 = scalar_lea.vmem [#allocation7], %s2548
        // Predicated region
        $region45: #{tpu_custom_call.1} parent=35 // pred_check
          %p2550 = pneg %p129
        $region46: #{tpu_custom_call.1} parent=35 // pred_check_branch
          %2552 = sbr.rel (%p2550) target = $region48
        $region47: #{tpu_custom_call.1} parent=35 // pred_region
          %s2553 = smul.u32 4, %s22
          %2555 = vsyncadd %s2546, 0
          %s2556 = smul.addr %s2553, 4
          %s2557 = smul.addr %s2556, 4
          %s2558 = scalar_lea.hbm %s4, %s2557
          %s2559 = sshll.u32 %s2549, 4
          %s2560 = int_to_ptr.vmem [resolvable:$true] %s2559
          %s2561 = sshll.u32 %s2558, 4
          %s2562 = int_to_ptr.hbm [resolvable:$true] %s2561
          %2567 = dma.vmem_to_hbm [thread:$0]  %s2560, 1024, %s2562, %s2546, 128, 128, 8
        $region48: #{tpu_custom_call.1} parent=35 // pred_fallthru
          _
      $region36: #{tpu_custom_call.1} parent=5 // pred_fallthru
        _
      %p2568 = scmp.le.s32.totalorder 2, %s17
      // Predicated region
      $region49: #{tpu_custom_call.1} parent=5 // pred_check
        %p2569 = pneg %p2568
      $region50: #{tpu_custom_call.1} parent=5 // pred_check_branch
        %2571 = sbr.rel (%p2569) target = $region52
      $region51: #{tpu_custom_call.1} parent=5 // pred_region
        %s2572 = ssub.s32 %s17, 2
        // Predicated region
        $region53: #{tpu_custom_call.1} parent=51 // pred_check
          %p2573 = pneg %p135
        $region54: #{tpu_custom_call.1} parent=51 // pred_check_branch
          %2575 = sbr.rel (%p2573) target = $region56
        $region55: #{tpu_custom_call.1} parent=51 // pred_region
          %s2576 = sand.u32 %s120, 1
          %s2577 = scalar_lea.sflag [#allocation4], %s2576
          %s2578 = sand.u32 %s120, 1
          %s2579 = smul.addr %s2578, 64
          %s2580 = scalar_lea.vmem [#allocation7], %s2579
          %2582 = dma.done %s2577, 1024
        $region56: #{tpu_custom_call.1} parent=51 // pred_fallthru
          _
      $region52: #{tpu_custom_call.1} parent=5 // pred_fallthru
        _
    $region6: #{tpu_custom_call.1} parent=1 // loop_footer
      %s21 = sadd.s32 1, %s17
    $region7: #{tpu_custom_call.1} parent=1 // loop_footer_branch
      %16 = sbr.rel target = $region3
    $region8: #{tpu_custom_call.1} parent=1 // loop_exit
      _
    %2583 = vsyncpa [#allocation3], 1
    %s2584 = scalar_lea.sflag [#allocation3], 1
    %2585 = vsyncpa %s2584, 1
    %2586 = vsyncpa [#allocation6], 1
    %2587 = vsyncpa [#allocation4], 1
    %s2588 = scalar_lea.sflag [#allocation4], 1
    %2589 = vsyncpa %s2588, 1

</llo_original>
